<compile_context>
chip_gen: v6e
topology: v6e:2x2x1
jax: 0.10.0
libtpu: 0.0.40
codegen_flags: <defaults>
</compile_context>

<pallas_src>
import functools
import math

import jax
import jax.numpy as jnp
from jax import lax
from jax.experimental import pallas as pl
from jax.experimental.pallas import tpu as pltpu


def _pick_tile(n):
    """MXU-aligned tile width: 256 (native on v6e/v7x) when it divides n, else 128 (v5e).
    At real model sizes also cap so double-buffered weight tiles fit VMEM
    (v7x: 64 MiB total, 32 MiB scoped default)."""
    return 256 if n % 256 == 0 else 128


# ---------------- fused RMSNorm + matmul (QKV projection, output head) ------

def _norm_matmul_kernel(x_ref, g_ref, w_ref, o_ref, *, eps):
    # x: (M, K) f32 residual stream, g: (1, K) f32, w: (K, tn) bf16.
    x = x_ref[...].astype(jnp.float32)
    ms = jnp.mean(x * x, axis=-1, keepdims=True)
    xn = (x * lax.rsqrt(ms + eps)) * g_ref[...]          # RMSNorm (VPU/EUP, hidden under DMA)
    o_ref[...] = jnp.dot(xn.astype(w_ref.dtype), w_ref[...],
                         preferred_element_type=jnp.float32)


def fused_rmsnorm_matmul(x, gamma, w, eps):
    """y = rmsnorm(x; gamma, eps) @ w ; x: (M, K) f32, w: (K, N) bf16 -> (M, N) f32."""
    M, K = x.shape
    N = w.shape[1]
    tn = _pick_tile(N)
    # TODO(synk): K is kept un-tiled because the norm needs the full row; for very
    # large K (and huge vocab heads) add a K grid axis + accumulator like _matmul_kernel.
    return pl.pallas_call(
        functools.partial(_norm_matmul_kernel, eps=eps),
        grid=(N // tn,),
        in_specs=[pl.BlockSpec((M, K), lambda j: (0, 0)),
                  pl.BlockSpec((1, K), lambda j: (0, 0)),
                  pl.BlockSpec((K, tn), lambda j: (0, j))],
        out_specs=pl.BlockSpec((M, tn), lambda j: (0, j)),
        out_shape=jax.ShapeDtypeStruct((M, N), jnp.float32),
        compiler_params=pltpu.CompilerParams(
            dimension_semantics=("parallel",)),
    )(x, gamma.reshape(1, K), w)


# ---------------- plain tiled matmul (wo projection) ------------------------

def _matmul_kernel(x_ref, w_ref, o_ref, acc_ref):
    k = pl.program_id(1)

    @pl.when(k == 0)
    def _():
        acc_ref[...] = jnp.zeros_like(acc_ref)

    acc_ref[...] += jnp.dot(x_ref[...].astype(w_ref.dtype), w_ref[...],
                            preferred_element_type=jnp.float32)

    @pl.when(k == pl.num_programs(1) - 1)
    def _():
        o_ref[...] = acc_ref[...]


def matmul(x, w):
    """y = x @ w ; x: (M, K) f32, w: (K, N) bf16 -> (M, N) f32, tiled over N and K."""
    M, K = x.shape
    N = w.shape[1]
    tn = _pick_tile(N)
    tk = _pick_tile(K)
    return pl.pallas_call(
        _matmul_kernel,
        grid=(N // tn, K // tk),
        in_specs=[pl.BlockSpec((M, tk), lambda j, k: (0, k)),
                  pl.BlockSpec((tk, tn), lambda j, k: (k, j))],
        out_specs=pl.BlockSpec((M, tn), lambda j, k: (0, j)),
        out_shape=jax.ShapeDtypeStruct((M, N), jnp.float32),
        scratch_shapes=[pltpu.VMEM((M, tn), jnp.float32)],
        compiler_params=pltpu.CompilerParams(
            dimension_semantics=("parallel", "arbitrary")),
    )(x, w)


# ---------------- fused RMSNorm + SwiGLU FFN (blocked over hidden dim) ------

def _swiglu_kernel(x_ref, g_ref, w1_ref, w3_ref, w2_ref, o_ref, xn_ref, *, eps):
    j = pl.program_id(0)

    @pl.when(j == 0)
    def _():
        x = x_ref[...].astype(jnp.float32)
        ms = jnp.mean(x * x, axis=-1, keepdims=True)
        xn_ref[...] = ((x * lax.rsqrt(ms + eps)) * g_ref[...]).astype(xn_ref.dtype)
        o_ref[...] = jnp.zeros_like(o_ref)

    xn = xn_ref[...]                                                     # bf16 (M, D)
    h1 = jnp.dot(xn, w1_ref[...], preferred_element_type=jnp.float32)    # (M, th)
    h3 = jnp.dot(xn, w3_ref[...], preferred_element_type=jnp.float32)
    hh = (h1 * jax.nn.sigmoid(h1)) * h3                                  # silu in f32
    o_ref[...] += jnp.dot(hh.astype(w2_ref.dtype), w2_ref[...],
                          preferred_element_type=jnp.float32)            # f32 accumulate


def fused_rmsnorm_swiglu(x, gamma, w1, w3, w2, eps):
    """w2 @ (silu(rmsnorm(x) @ w1) * (rmsnorm(x) @ w3)), blocked over the hidden dim."""
    M, D = x.shape
    H = w1.shape[1]
    th = _pick_tile(H)
    return pl.pallas_call(
        functools.partial(_swiglu_kernel, eps=eps),
        grid=(H // th,),
        in_specs=[pl.BlockSpec((M, D), lambda j: (0, 0)),
                  pl.BlockSpec((1, D), lambda j: (0, 0)),
                  pl.BlockSpec((D, th), lambda j: (0, j)),
                  pl.BlockSpec((D, th), lambda j: (0, j)),
                  pl.BlockSpec((th, D), lambda j: (j, 0))],
        out_specs=pl.BlockSpec((M, D), lambda j: (0, 0)),     # resident accumulator
        out_shape=jax.ShapeDtypeStruct((M, D), jnp.float32),
        scratch_shapes=[pltpu.VMEM((M, D), w1.dtype)],        # normalized x, bf16
        compiler_params=pltpu.CompilerParams(
            dimension_semantics=("arbitrary",)),
    )(x, gamma.reshape(1, D), w1, w3, w2)


# ---------------- GQA attention core (single query token) -------------------

def _attn_kernel(q_ref, k_ref, v_ref, o_ref, *, scale):
    # One (batch, kv-head) pair: q (n_rep, Dh), k/v (T, Dh), out (n_rep, Dh).
    s = lax.dot_general(q_ref[...], k_ref[...], (((1,), (1,)), ((), ())),
                        preferred_element_type=jnp.float32) * scale      # (n_rep, T), MXU
    s = s - jnp.max(s, axis=-1, keepdims=True)
    e = jnp.exp(s)
    p = e * pl.reciprocal(jnp.sum(e, axis=-1, keepdims=True), approx=True)  # EUP recip
    o_ref[...] = jnp.dot(p, v_ref[...], preferred_element_type=jnp.float32)


def attention_core(q, k, v, head_dim):
    """q: (B, n_kv, n_rep, Dh); k, v: (B, n_kv, T, Dh) un-repeated cache -> (B, n_kv, n_rep, Dh).

    The KV-head for each query-head group is selected by the BlockSpec index_map,
    so no repeat_kv / transpose copies of the cache are ever materialized in HBM.
    """
    B, n_kv, n_rep, Dh = q.shape
    T = k.shape[2]
    scale = 1.0 / math.sqrt(head_dim)
    # TODO(synk): output last dim is Dh (<128); a lane-dense (B, n_heads*Dh) output
    # would need an in-kernel (n_rep, Dh)->(1, n_rep*Dh) relayout — skipped for robustness.
    return pl.pallas_call(
        functools.partial(_attn_kernel, scale=scale),
        grid=(B, n_kv),
        in_specs=[pl.BlockSpec((None, None, n_rep, Dh), lambda b, g: (b, g, 0, 0)),
                  pl.BlockSpec((None, None, T, Dh), lambda b, g: (b, g, 0, 0)),
                  pl.BlockSpec((None, None, T, Dh), lambda b, g: (b, g, 0, 0))],
        out_specs=pl.BlockSpec((None, None, n_rep, Dh), lambda b, g: (b, g, 0, 0)),
        out_shape=jax.ShapeDtypeStruct((B, n_kv, n_rep, Dh), jnp.float32),
        compiler_params=pltpu.CompilerParams(
            dimension_semantics=("parallel", "parallel")),
    )(q, k, v)


# ----------------------------- JAX glue -------------------------------------

def precompute_freqs(head_dim, max_pos, theta=10000.0):
    assert head_dim % 2 == 0
    inv = 1.0 / (theta ** (jnp.arange(0, head_dim, 2, dtype=jnp.float32) / head_dim))
    m = jnp.arange(max_pos, dtype=jnp.float32)
    freqs = jnp.outer(m, inv)                       # (max_pos, head_dim/2)
    return jnp.cos(freqs), jnp.sin(freqs)


def apply_rope(x, cos, sin):
    # x: (B, S, H, Dh); cos/sin: (S, Dh//2)  -- complex multiply on (re, im) pairs
    B, S, H, Dh = x.shape
    xr = x.reshape(B, S, H, Dh // 2, 2)
    x0, x1 = xr[..., 0], xr[..., 1]
    c = cos[None, :, None, :]
    s = sin[None, :, None, :]
    o0 = x0 * c - x1 * s
    o1 = x0 * s + x1 * c
    return jnp.stack([o0, o1], axis=-1).reshape(B, S, H, Dh)


def init_params(key, cfg):
    dim, n_heads, n_kv = cfg["dim"], cfg["n_heads"], cfg["n_kv_heads"]
    head_dim = dim // n_heads
    hidden = int(2 * (4 * dim) / 3)
    mult = cfg["multiple_of"]
    hidden = mult * ((hidden + mult - 1) // mult)
    cfg["hidden_dim"] = hidden
    wdt = jnp.bfloat16   # bf16 weights: halves HBM weight streaming at decode

    def lin(k, din, dout):
        return (jax.random.normal(k, (din, dout), jnp.float32) * 0.02).astype(wdt)

    keys = jax.random.split(key, 2 + cfg["n_layers"])
    params = {
        "emb": (jax.random.normal(keys[0], (cfg["vocab_size"], dim),
                                  jnp.float32) * 0.02).astype(wdt),
        "norm_w": jnp.ones((dim,), jnp.float32),
        "out_w": lin(keys[1], dim, cfg["vocab_size"]),
        "layers": [],
    }
    for li in range(cfg["n_layers"]):
        lk = jax.random.split(keys[2 + li], 7)
        wq = lin(lk[0], dim, n_heads * head_dim)
        wk = lin(lk[1], dim, n_kv * head_dim)
        wv = lin(lk[2], dim, n_kv * head_dim)
        params["layers"].append({
            "attn_norm_w": jnp.ones((dim,), jnp.float32),
            "ffn_norm_w": jnp.ones((dim,), jnp.float32),
            "wqkv": jnp.concatenate([wq, wk, wv], axis=1),   # fused QKV weight
            "wo": lin(lk[3], n_heads * head_dim, dim),
            "w1": lin(lk[4], dim, hidden),
            "w3": lin(lk[5], dim, hidden),
            "w2": lin(lk[6], hidden, dim),
        })
    return params


def transformer_forward(params, caches, tokens, start_pos, cos_tab, sin_tab, cfg):
    B, S = tokens.shape
    assert S == 1, "Only one token at a time can be processed"
    dim, n_heads, n_kv = cfg["dim"], cfg["n_heads"], cfg["n_kv_heads"]
    head_dim = dim // n_heads
    n_rep = n_heads // n_kv
    eps = cfg["norm_eps"]
    nq = n_heads * head_dim
    nk = n_kv * head_dim

    cos = cos_tab[start_pos:start_pos + S]
    sin = sin_tab[start_pos:start_pos + S]

    h = jnp.take(params["emb"], tokens, axis=0).astype(jnp.float32)  # (B, 1, dim)
    new_caches = []

    for li, lp in enumerate(params["layers"]):
        x2d = h.reshape(B * S, dim)
        # Fused RMSNorm + QKV projection: one pallas_call, one pass over x, one weight stream.
        qkv = fused_rmsnorm_matmul(x2d, lp["attn_norm_w"], lp["wqkv"], eps)
        xq = qkv[:, :nq].reshape(B, S, n_heads, head_dim)
        xk = qkv[:, nq:nq + nk].reshape(B, S, n_kv, head_dim)
        xv = qkv[:, nq + nk:].reshape(B, S, n_kv, head_dim)

        xq = apply_rope(xq, cos, sin)
        xk = apply_rope(xk, cos, sin)

        # KV cache is (max_batch, n_kv, max_seq, head_dim); write the single new row.
        # (Donated under jit in main -> in-place update, no full-cache copy.)
        cache_k, cache_v = caches[li]
        xk_t = jnp.transpose(xk, (0, 2, 1, 3))        # (B, n_kv, 1, Dh) -- new token only
        xv_t = jnp.transpose(xv, (0, 2, 1, 3))
        cache_k = lax.dynamic_update_slice(cache_k, xk_t, (0, 0, start_pos, 0))
        cache_v = lax.dynamic_update_slice(cache_v, xv_t, (0, 0, start_pos, 0))
        new_caches.append((cache_k, cache_v))

        T = start_pos + S
        k = cache_k[:B, :, :T]                        # (B, n_kv, T, Dh) -- no repeat_kv
        v = cache_v[:B, :, :T]
        q = xq.reshape(B, n_kv, n_rep, head_dim)      # query heads grouped per KV head

        # NOTE: like the torch reference with a fresh cache, positions < start_pos hold
        # zero keys/values and still receive softmax mass (no masking), by design.
        o = attention_core(q, k, v, head_dim)         # Pallas, (B, n_kv, n_rep, Dh)
        o2d = o.reshape(B * S, n_heads * head_dim)    # free reshape, matches torch layout
        attn_out = matmul(o2d, lp["wo"])              # Pallas tiled matmul

        h = h + attn_out.reshape(B, S, dim)           # residual

        # Fused RMSNorm + SwiGLU FFN, blocked over hidden dim with f32 accumulator.
        ff = fused_rmsnorm_swiglu(h.reshape(B * S, dim), lp["ffn_norm_w"],
                                  lp["w1"], lp["w3"], lp["w2"], eps)
        h = h + ff.reshape(B, S, dim)                 # residual

    # Fused final RMSNorm + output head.
    logits = fused_rmsnorm_matmul(h.reshape(B * S, dim), params["norm_w"],
                                  params["out_w"], eps)
    return logits.reshape(B, S, cfg["vocab_size"]).astype(jnp.float32), new_caches


# ----------------------------- main -----------------------------------------

if __name__ == "__main__":
    cfg = {
        "dim": 128,
        "n_layers": 2,
        "n_heads": 4,
        "n_kv_heads": 2,
        "vocab_size": 256,
        "multiple_of": 64,
        "norm_eps": 1e-5,
        "max_batch_size": 2,
        "max_seq_len": 16,
    }
    head_dim = cfg["dim"] // cfg["n_heads"]

    key = jax.random.PRNGKey(0)
    pkey, tkey = jax.random.split(key)
    params = init_params(pkey, cfg)

    # RoPE tables built once, outside the per-token forward (hoisted per feedback).
    cos_tab, sin_tab = precompute_freqs(head_dim, cfg["max_seq_len"] * 2)

    B, S = cfg["max_batch_size"], 1
    tokens = jax.random.randint(tkey, (B, S), 0, cfg["vocab_size"], dtype=jnp.int32)
    start_pos = 3  # cache positions < start_pos are zeros, same as a fresh torch cache

    # KV cache layout (batch, n_kv_heads, seq, head_dim) so attention BlockSpecs can
    # select the KV head directly; semantics identical to the torch module's cache.
    caches = [
        (jnp.zeros((cfg["max_batch_size"], cfg["n_kv_heads"],
                    cfg["max_seq_len"], head_dim), jnp.float32),
         jnp.zeros((cfg["max_batch_size"], cfg["n_kv_heads"],
                    cfg["max_seq_len"], head_dim), jnp.float32))
        for _ in range(cfg["n_layers"])
    ]

    # jit the whole decode step; donate the caches so the row update is in-place.
    @functools.partial(jax.jit, static_argnums=(3,), donate_argnums=(1,))
    def fwd(p, c, t, sp, cos, sin):
        return transformer_forward(p, c, t, sp, cos, sin, cfg)

    logits, new_caches = fwd(params, caches, tokens, start_pos, cos_tab, sin_tab)
    logits = jax.block_until_ready(logits)
    assert logits.shape == (B, S, cfg["vocab_size"])
    assert logits.dtype == jnp.float32
    print("KERNEL_OK")
</pallas_src>

<mosaic_0001>
module attributes {stable_mosaic.version = 11 : i64} {
  func.func @_norm_matmul_kernel(%arg0: i32, %arg1: memref<2x128xf32, #tpu.memory_space<vmem>>, %arg2: memref<1x128xf32, #tpu.memory_space<vmem>>, %arg3: memref<128x256xbf16, #tpu.memory_space<vmem>>, %arg4: memref<2x256xf32, #tpu.memory_space<vmem>>) attributes {dimension_semantics = [#tpu.dimension_semantics<parallel>], iteration_bounds = array<i64: 1>, scalar_prefetch = 0 : i64, scratch_operands = 0 : i64, tpu.core_type = #tpu.core_type<tc>, window_params = [{pipeline_mode = #tpu.pipeline_mode<synchronous>, transform_indices = @transform_0, window_bounds = array<i64: 2, 128>}, {pipeline_mode = #tpu.pipeline_mode<synchronous>, transform_indices = @transform_1, window_bounds = array<i64: 1, 128>}, {transform_indices = @transform_2, window_bounds = array<i64: 128, 256>}, {transform_indices = @transform_3, window_bounds = array<i64: 2, 256>}]} {
    %c0 = arith.constant 0 : index
    %c0_0 = arith.constant 0 : index
    %0 = vector.load %arg1[%c0, %c0_0] : memref<2x128xf32, #tpu.memory_space<vmem>>, vector<2x128xf32>
    %1 = arith.mulf %0, %0 : vector<2x128xf32>
    %cst = arith.constant dense<0.000000e+00> : vector<2xf32>
    %2 = vector.multi_reduction <add>, %1, %cst [1] : vector<2x128xf32> to vector<2xf32>
    %3 = vector.shape_cast %2 : vector<2xf32> to vector<2x1xf32>
    %cst_1 = arith.constant 1.280000e+02 : f32
    %4 = vector.broadcast %cst_1 : f32 to vector<2x1xf32>
    %5 = arith.divf %3, %4 : vector<2x1xf32>
    %cst_2 = arith.constant 9.99999974E-6 : f32
    %6 = vector.broadcast %cst_2 : f32 to vector<2x1xf32>
    %7 = arith.addf %5, %6 : vector<2x1xf32>
    %8 = math.rsqrt %7 : vector<2x1xf32>
    %9 = vector.broadcast %8 : vector<2x1xf32> to vector<2x128xf32>
    %10 = arith.mulf %0, %9 : vector<2x128xf32>
    %c0_3 = arith.constant 0 : index
    %c0_4 = arith.constant 0 : index
    %11 = vector.load %arg2[%c0_3, %c0_4] : memref<1x128xf32, #tpu.memory_space<vmem>>, vector<1x128xf32>
    %12 = vector.broadcast %11 : vector<1x128xf32> to vector<2x128xf32>
    %13 = arith.mulf %10, %12 : vector<2x128xf32>
    %14 = arith.truncf %13 : vector<2x128xf32> to vector<2x128xbf16>
    %c0_5 = arith.constant 0 : index
    %c0_6 = arith.constant 0 : index
    %15 = vector.load %arg3[%c0_5, %c0_6] : memref<128x256xbf16, #tpu.memory_space<vmem>>, vector<128x256xbf16>
    %cst_7 = arith.constant dense<0.000000e+00> : vector<2x256xf32>
    %16 = tpu.matmul %14, %15, %cst_7 {dimension_numbers = #tpu.dot_dimension_numbers<[1], [0], [0], [1], [0, 0, 1, 1], [], []>} : vector<2x128xbf16>, vector<128x256xbf16>, vector<2x256xf32> -> vector<2x256xf32>
    %c0_8 = arith.constant 0 : index
    %c0_9 = arith.constant 0 : index
    %17 = vector.load %arg4[%c0_8, %c0_9] : memref<2x256xf32, #tpu.memory_space<vmem>>, vector<2x256xf32>
    tpu.vector_store %arg4[%c0_8, %c0_9], %16 {strides = array<i32>} : memref<2x256xf32, #tpu.memory_space<vmem>>, vector<2x256xf32>,
    return
  }
  func.func @transform_0(%arg0: i32) -> (i32, i32) {
    %c0_i32 = arith.constant 0 : i32
    %c0_i32_0 = arith.constant 0 : i32
    %c0_i32_1 = arith.constant 0 : i32
    return %c0_i32, %c0_i32_0 : i32, i32
  }
  func.func @transform_1(%arg0: i32) -> (i32, i32) {
    %c0_i32 = arith.constant 0 : i32
    %c0_i32_0 = arith.constant 0 : i32
    %c0_i32_1 = arith.constant 0 : i32
    return %c0_i32, %c0_i32_0 : i32, i32
  }
  func.func @transform_2(%arg0: i32) -> (i32, i32) {
    %c0_i32 = arith.constant 0 : i32
    %c0_i32_0 = arith.constant 0 : i32
    return %c0_i32, %arg0 : i32, i32
  }
  func.func @transform_3(%arg0: i32) -> (i32, i32) {
    %c0_i32 = arith.constant 0 : i32
    %c0_i32_0 = arith.constant 0 : i32
    return %c0_i32, %arg0 : i32, i32
  }
}

module attributes {stable_mosaic.version = 11 : i64} {
  func.func @_attn_kernel(%arg0: i32, %arg1: i32, %arg2: memref<1x1x2x32xf32, #tpu.memory_space<vmem>>, %arg3: memref<1x1x4x32xf32, #tpu.memory_space<vmem>>, %arg4: memref<1x1x4x32xf32, #tpu.memory_space<vmem>>, %arg5: memref<1x1x2x32xf32, #tpu.memory_space<vmem>>) attributes {dimension_semantics = [#tpu.dimension_semantics<parallel>, #tpu.dimension_semantics<parallel>], iteration_bounds = array<i64: 2, 2>, scalar_prefetch = 0 : i64, scratch_operands = 0 : i64, tpu.core_type = #tpu.core_type<tc>, window_params = [{transform_indices = @transform_0, window_bounds = array<i64: 1, 1, 2, 32>}, {transform_indices = @transform_1, window_bounds = array<i64: 1, 1, 4, 32>}, {transform_indices = @transform_2, window_bounds = array<i64: 1, 1, 4, 32>}, {transform_indices = @transform_3, window_bounds = array<i64: 1, 1, 2, 32>}]} {
    %c0 = arith.constant 0 : index
    %c0_0 = arith.constant 0 : index
    %c0_1 = arith.constant 0 : index
    %c0_2 = arith.constant 0 : index
    %0 = vector.load %arg2[%c0, %c0_0, %c0_1, %c0_2] : memref<1x1x2x32xf32, #tpu.memory_space<vmem>>, vector<1x1x2x32xf32>
    %1 = vector.shape_cast %0 : vector<1x1x2x32xf32> to vector<2x32xf32>
    %c0_3 = arith.constant 0 : index
    %c0_4 = arith.constant 0 : index
    %c0_5 = arith.constant 0 : index
    %c0_6 = arith.constant 0 : index
    %2 = vector.load %arg3[%c0_3, %c0_4, %c0_5, %c0_6] : memref<1x1x4x32xf32, #tpu.memory_space<vmem>>, vector<1x1x4x32xf32>
    %3 = vector.shape_cast %2 : vector<1x1x4x32xf32> to vector<4x32xf32>
    %cst = arith.constant dense<0.000000e+00> : vector<2x4xf32>
    %4 = tpu.matmul %1, %3, %cst {dimension_numbers = #tpu.dot_dimension_numbers<[1], [1], [0], [0], [0, 0, 1, 0], [], []>} : vector<2x32xf32>, vector<4x32xf32>, vector<2x4xf32> -> vector<2x4xf32>
    %cst_7 = arith.constant 0.176776692 : f32
    %5 = vector.broadcast %cst_7 : f32 to vector<2x4xf32>
    %6 = arith.mulf %4, %5 : vector<2x4xf32>
    %cst_8 = arith.constant dense<0xFF800000> : vector<2xf32>
    %7 = vector.multi_reduction <maximumf>, %6, %cst_8 [1] : vector<2x4xf32> to vector<2xf32>
    %8 = vector.shape_cast %7 : vector<2xf32> to vector<2x1xf32>
    %9 = vector.broadcast %8 : vector<2x1xf32> to vector<2x4xf32>
    %10 = arith.subf %6, %9 : vector<2x4xf32>
    %11 = math.exp %10 : vector<2x4xf32>
    %cst_9 = arith.constant dense<0.000000e+00> : vector<2xf32>
    %12 = vector.multi_reduction <add>, %11, %cst_9 [1] : vector<2x4xf32> to vector<2xf32>
    %13 = vector.shape_cast %12 : vector<2xf32> to vector<2x1xf32>
    %14 = tpu.reciprocal %13 {approx = true} : vector<2x1xf32> -> vector<2x1xf32>
    %15 = vector.broadcast %14 : vector<2x1xf32> to vector<2x4xf32>
    %16 = arith.mulf %11, %15 : vector<2x4xf32>
    %c0_10 = arith.constant 0 : index
    %c0_11 = arith.constant 0 : index
    %c0_12 = arith.constant 0 : index
    %c0_13 = arith.constant 0 : index
    %17 = vector.load %arg4[%c0_10, %c0_11, %c0_12, %c0_13] : memref<1x1x4x32xf32, #tpu.memory_space<vmem>>, vector<1x1x4x32xf32>
    %18 = vector.shape_cast %17 : vector<1x1x4x32xf32> to vector<4x32xf32>
    %cst_14 = arith.constant dense<0.000000e+00> : vector<2x32xf32>
    %19 = tpu.matmul %16, %18, %cst_14 {dimension_numbers = #tpu.dot_dimension_numbers<[1], [0], [0], [1], [0, 0, 1, 1], [], []>} : vector<2x4xf32>, vector<4x32xf32>, vector<2x32xf32> -> vector<2x32xf32>
    %c0_15 = arith.constant 0 : index
    %c0_16 = arith.constant 0 : index
    %c0_17 = arith.constant 0 : index
    %c0_18 = arith.constant 0 : index
    %20 = vector.load %arg5[%c0_15, %c0_16, %c0_17, %c0_18] : memref<1x1x2x32xf32, #tpu.memory_space<vmem>>, vector<1x1x2x32xf32>
    %21 = vector.shape_cast %20 : vector<1x1x2x32xf32> to vector<2x32xf32>
    %22 = vector.shape_cast %19 : vector<2x32xf32> to vector<1x1x2x32xf32>
    tpu.vector_store %arg5[%c0_15, %c0_16, %c0_17, %c0_18], %22 {strides = array<i32>} : memref<1x1x2x32xf32, #tpu.memory_space<vmem>>, vector<1x1x2x32xf32>,
    return
  }
  func.func @transform_0(%arg0: i32, %arg1: i32) -> (i32, i32, i32, i32) {
    %c0_i32 = arith.constant 0 : i32
    %c0_i32_0 = arith.constant 0 : i32
    %c0_i32_1 = arith.constant 0 : i32
    return %arg0, %arg1, %c0_i32, %c0_i32_0 : i32, i32, i32, i32
  }
  func.func @transform_1(%arg0: i32, %arg1: i32) -> (i32, i32, i32, i32) {
    %c0_i32 = arith.constant 0 : i32
    %c0_i32_0 = arith.constant 0 : i32
    %c0_i32_1 = arith.constant 0 : i32
    return %arg0, %arg1, %c0_i32, %c0_i32_0 : i32, i32, i32, i32
  }
  func.func @transform_2(%arg0: i32, %arg1: i32) -> (i32, i32, i32, i32) {
    %c0_i32 = arith.constant 0 : i32
    %c0_i32_0 = arith.constant 0 : i32
    %c0_i32_1 = arith.constant 0 : i32
    return %arg0, %arg1, %c0_i32, %c0_i32_0 : i32, i32, i32, i32
  }
  func.func @transform_3(%arg0: i32, %arg1: i32) -> (i32, i32, i32, i32) {
    %c0_i32 = arith.constant 0 : i32
    %c0_i32_0 = arith.constant 0 : i32
    %c0_i32_1 = arith.constant 0 : i32
    return %arg0, %arg1, %c0_i32, %c0_i32_0 : i32, i32, i32, i32
  }
}

module attributes {stable_mosaic.version = 11 : i64} {
  func.func @_matmul_kernel(%arg0: i32, %arg1: i32, %arg2: memref<2x128xf32, #tpu.memory_space<vmem>>, %arg3: memref<128x128xbf16, #tpu.memory_space<vmem>>, %arg4: memref<2x128xf32, #tpu.memory_space<vmem>>, %arg5: memref<2x128xf32, #tpu.memory_space<vmem>>) attributes {dimension_semantics = [#tpu.dimension_semantics<parallel>, #tpu.dimension_semantics<arbitrary>], iteration_bounds = array<i64: 1, 1>, scalar_prefetch = 0 : i64, scratch_operands = 1 : i64, tpu.core_type = #tpu.core_type<tc>, window_params = [{transform_indices = @transform_0, window_bounds = array<i64: 2, 128>}, {transform_indices = @transform_1, window_bounds = array<i64: 128, 128>}, {transform_indices = @transform_2, window_bounds = array<i64: 2, 128>}]} {
    %c0_i32 = arith.constant 0 : i32
    %0 = arith.cmpi eq, %arg1, %c0_i32 : i32
    %1 = arith.extui %0 : i1 to i32
    %c0_i32_0 = arith.constant 0 : i32
    %2 = arith.cmpi ne, %1, %c0_i32_0 : i32
    scf.if %2 {
      %cst_10 = arith.constant 0.000000e+00 : f32
      %13 = vector.broadcast %cst_10 : f32 to vector<2x128xf32>
      %c0_11 = arith.constant 0 : index
      %c0_12 = arith.constant 0 : index
      %14 = vector.load %arg5[%c0_11, %c0_12] : memref<2x128xf32, #tpu.memory_space<vmem>>, vector<2x128xf32>
      tpu.vector_store %arg5[%c0_11, %c0_12], %13 {strides = array<i32>} : memref<2x128xf32, #tpu.memory_space<vmem>>, vector<2x128xf32>,
    } else {
    }
    %c0 = arith.constant 0 : index
    %c0_1 = arith.constant 0 : index
    %3 = vector.load %arg5[%c0, %c0_1] : memref<2x128xf32, #tpu.memory_space<vmem>>, vector<2x128xf32>
    %c0_2 = arith.constant 0 : index
    %c0_3 = arith.constant 0 : index
    %4 = vector.load %arg2[%c0_2, %c0_3] : memref<2x128xf32, #tpu.memory_space<vmem>>, vector<2x128xf32>
    %5 = arith.truncf %4 : vector<2x128xf32> to vector<2x128xbf16>
    %c0_4 = arith.constant 0 : index
    %c0_5 = arith.constant 0 : index
    %6 = vector.load %arg3[%c0_4, %c0_5] : memref<128x128xbf16, #tpu.memory_space<vmem>>, vector<128x128xbf16>
    %cst = arith.constant dense<0.000000e+00> : vector<2x128xf32>
    %7 = tpu.matmul %5, %6, %cst {dimension_numbers = #tpu.dot_dimension_numbers<[1], [0], [0], [1], [0, 0, 1, 1], [], []>} : vector<2x128xbf16>, vector<128x128xbf16>, vector<2x128xf32> -> vector<2x128xf32>
    %8 = arith.addf %3, %7 : vector<2x128xf32>
    %c0_6 = arith.constant 0 : index
    %c0_7 = arith.constant 0 : index
    %9 = vector.load %arg5[%c0_6, %c0_7] : memref<2x128xf32, #tpu.memory_space<vmem>>, vector<2x128xf32>
    tpu.vector_store %arg5[%c0_6, %c0_7], %8 {strides = array<i32>} : memref<2x128xf32, #tpu.memory_space<vmem>>, vector<2x128xf32>,
    %c0_i32_8 = arith.constant 0 : i32
    %10 = arith.cmpi eq, %arg1, %c0_i32_8 : i32
    %11 = arith.extui %10 : i1 to i32
    %c0_i32_9 = arith.constant 0 : i32
    %12 = arith.cmpi ne, %11, %c0_i32_9 : i32
    scf.if %12 {
      %c0_10 = arith.constant 0 : index
      %c0_11 = arith.constant 0 : index
      %13 = vector.load %arg5[%c0_10, %c0_11] : memref<2x128xf32, #tpu.memory_space<vmem>>, vector<2x128xf32>
      %c0_12 = arith.constant 0 : index
      %c0_13 = arith.constant 0 : index
      %14 = vector.load %arg4[%c0_12, %c0_13] : memref<2x128xf32, #tpu.memory_space<vmem>>, vector<2x128xf32>
      tpu.vector_store %arg4[%c0_12, %c0_13], %13 {strides = array<i32>} : memref<2x128xf32, #tpu.memory_space<vmem>>, vector<2x128xf32>,
    } else {
    }
    return
  }
  func.func @transform_0(%arg0: i32, %arg1: i32) -> (i32, i32) {
    %c0_i32 = arith.constant 0 : i32
    %c0_i32_0 = arith.constant 0 : i32
    return %c0_i32, %arg1 : i32, i32
  }
  func.func @transform_1(%arg0: i32, %arg1: i32) -> (i32, i32) {
    %c0_i32 = arith.constant 0 : i32
    return %arg1, %arg0 : i32, i32
  }
  func.func @transform_2(%arg0: i32, %arg1: i32) -> (i32, i32) {
    %c0_i32 = arith.constant 0 : i32
    %c0_i32_0 = arith.constant 0 : i32
    return %c0_i32, %arg0 : i32, i32
  }
}

module attributes {stable_mosaic.version = 11 : i64} {
  func.func @_norm_matmul_kernel(%arg0: i32, %arg1: memref<2x128xf32, #tpu.memory_space<vmem>>, %arg2: memref<1x128xf32, #tpu.memory_space<vmem>>, %arg3: memref<128x256xbf16, #tpu.memory_space<vmem>>, %arg4: memref<2x256xf32, #tpu.memory_space<vmem>>) attributes {dimension_semantics = [#tpu.dimension_semantics<parallel>], iteration_bounds = array<i64: 1>, scalar_prefetch = 0 : i64, scratch_operands = 0 : i64, tpu.core_type = #tpu.core_type<tc>, window_params = [{pipeline_mode = #tpu.pipeline_mode<synchronous>, transform_indices = @transform_0, window_bounds = array<i64: 2, 128>}, {pipeline_mode = #tpu.pipeline_mode<synchronous>, transform_indices = @transform_1, window_bounds = array<i64: 1, 128>}, {transform_indices = @transform_2, window_bounds = array<i64: 128, 256>}, {transform_indices = @transform_3, window_bounds = array<i64: 2, 256>}]} {
    %c0 = arith.constant 0 : index
    %c0_0 = arith.constant 0 : index
    %0 = vector.load %arg1[%c0, %c0_0] : memref<2x128xf32, #tpu.memory_space<vmem>>, vector<2x128xf32>
    %1 = arith.mulf %0, %0 : vector<2x128xf32>
    %cst = arith.constant dense<0.000000e+00> : vector<2xf32>
    %2 = vector.multi_reduction <add>, %1, %cst [1] : vector<2x128xf32> to vector<2xf32>
    %3 = vector.shape_cast %2 : vector<2xf32> to vector<2x1xf32>
    %cst_1 = arith.constant 1.280000e+02 : f32
    %4 = vector.broadcast %cst_1 : f32 to vector<2x1xf32>
    %5 = arith.divf %3, %4 : vector<2x1xf32>
    %cst_2 = arith.constant 9.99999974E-6 : f32
    %6 = vector.broadcast %cst_2 : f32 to vector<2x1xf32>
    %7 = arith.addf %5, %6 : vector<2x1xf32>
    %8 = math.rsqrt %7 : vector<2x1xf32>
    %9 = vector.broadcast %8 : vector<2x1xf32> to vector<2x128xf32>
    %10 = arith.mulf %0, %9 : vector<2x128xf32>
    %c0_3 = arith.constant 0 : index
    %c0_4 = arith.constant 0 : index
    %11 = vector.load %arg2[%c0_3, %c0_4] : memref<1x128xf32, #tpu.memory_space<vmem>>, vector<1x128xf32>
    %12 = vector.broadcast %11 : vector<1x128xf32> to vector<2x128xf32>
    %13 = arith.mulf %10, %12 : vector<2x128xf32>
    %14 = arith.truncf %13 : vector<2x128xf32> to vector<2x128xbf16>
    %c0_5 = arith.constant 0 : index
    %c0_6 = arith.constant 0 : index
    %15 = vector.load %arg3[%c0_5, %c0_6] : memref<128x256xbf16, #tpu.memory_space<vmem>>, vector<128x256xbf16>
    %cst_7 = arith.constant dense<0.000000e+00> : vector<2x256xf32>
    %16 = tpu.matmul %14, %15, %cst_7 {dimension_numbers = #tpu.dot_dimension_numbers<[1], [0], [0], [1], [0, 0, 1, 1], [], []>} : vector<2x128xbf16>, vector<128x256xbf16>, vector<2x256xf32> -> vector<2x256xf32>
    %c0_8 = arith.constant 0 : index
    %c0_9 = arith.constant 0 : index
    %17 = vector.load %arg4[%c0_8, %c0_9] : memref<2x256xf32, #tpu.memory_space<vmem>>, vector<2x256xf32>
    tpu.vector_store %arg4[%c0_8, %c0_9], %16 {strides = array<i32>} : memref<2x256xf32, #tpu.memory_space<vmem>>, vector<2x256xf32>,
    return
  }
  func.func @transform_0(%arg0: i32) -> (i32, i32) {
    %c0_i32 = arith.constant 0 : i32
    %c0_i32_0 = arith.constant 0 : i32
    %c0_i32_1 = arith.constant 0 : i32
    return %c0_i32, %c0_i32_0 : i32, i32
  }
  func.func @transform_1(%arg0: i32) -> (i32, i32) {
    %c0_i32 = arith.constant 0 : i32
    %c0_i32_0 = arith.constant 0 : i32
    %c0_i32_1 = arith.constant 0 : i32
    return %c0_i32, %c0_i32_0 : i32, i32
  }
  func.func @transform_2(%arg0: i32) -> (i32, i32) {
    %c0_i32 = arith.constant 0 : i32
    %c0_i32_0 = arith.constant 0 : i32
    return %c0_i32, %arg0 : i32, i32
  }
  func.func @transform_3(%arg0: i32) -> (i32, i32) {
    %c0_i32 = arith.constant 0 : i32
    %c0_i32_0 = arith.constant 0 : i32
    return %c0_i32, %arg0 : i32, i32
  }
}

module attributes {stable_mosaic.version = 11 : i64} {
  func.func @_swiglu_kernel(%arg0: i32, %arg1: memref<2x128xf32, #tpu.memory_space<vmem>>, %arg2: memref<1x128xf32, #tpu.memory_space<vmem>>, %arg3: memref<128x128xbf16, #tpu.memory_space<vmem>>, %arg4: memref<128x128xbf16, #tpu.memory_space<vmem>>, %arg5: memref<128x128xbf16, #tpu.memory_space<vmem>>, %arg6: memref<2x128xf32, #tpu.memory_space<vmem>>, %arg7: memref<2x128xbf16, #tpu.memory_space<vmem>>) attributes {dimension_semantics = [#tpu.dimension_semantics<arbitrary>], iteration_bounds = array<i64: 3>, scalar_prefetch = 0 : i64, scratch_operands = 1 : i64, tpu.core_type = #tpu.core_type<tc>, window_params = [{pipeline_mode = #tpu.pipeline_mode<synchronous>, transform_indices = @transform_0, window_bounds = array<i64: 2, 128>}, {pipeline_mode = #tpu.pipeline_mode<synchronous>, transform_indices = @transform_1, window_bounds = array<i64: 1, 128>}, {transform_indices = @transform_2, window_bounds = array<i64: 128, 128>}, {transform_indices = @transform_3, window_bounds = array<i64: 128, 128>}, {transform_indices = @transform_4, window_bounds = array<i64: 128, 128>}, {pipeline_mode = #tpu.pipeline_mode<synchronous>, transform_indices = @transform_5, window_bounds = array<i64: 2, 128>}]} {
    %c0_i32 = arith.constant 0 : i32
    %0 = arith.cmpi eq, %arg0, %c0_i32 : i32
    %1 = arith.extui %0 : i1 to i32
    %c0_i32_0 = arith.constant 0 : i32
    %2 = arith.cmpi ne, %1, %c0_i32_0 : i32
    scf.if %2 {
      %c0_15 = arith.constant 0 : index
      %c0_16 = arith.constant 0 : index
      %21 = vector.load %arg1[%c0_15, %c0_16] : memref<2x128xf32, #tpu.memory_space<vmem>>, vector<2x128xf32>
      %22 = arith.mulf %21, %21 : vector<2x128xf32>
      %cst_17 = arith.constant dense<0.000000e+00> : vector<2xf32>
      %23 = vector.multi_reduction <add>, %22, %cst_17 [1] : vector<2x128xf32> to vector<2xf32>
      %24 = vector.shape_cast %23 : vector<2xf32> to vector<2x1xf32>
      %cst_18 = arith.constant 1.280000e+02 : f32
      %25 = vector.broadcast %cst_18 : f32 to vector<2x1xf32>
      %26 = arith.divf %24, %25 : vector<2x1xf32>
      %cst_19 = arith.constant 9.99999974E-6 : f32
      %27 = vector.broadcast %cst_19 : f32 to vector<2x1xf32>
      %28 = arith.addf %26, %27 : vector<2x1xf32>
      %29 = math.rsqrt %28 : vector<2x1xf32>
      %30 = vector.broadcast %29 : vector<2x1xf32> to vector<2x128xf32>
      %31 = arith.mulf %21, %30 : vector<2x128xf32>
      %c0_20 = arith.constant 0 : index
      %c0_21 = arith.constant 0 : index
      %32 = vector.load %arg2[%c0_20, %c0_21] : memref<1x128xf32, #tpu.memory_space<vmem>>, vector<1x128xf32>
      %33 = vector.broadcast %32 : vector<1x128xf32> to vector<2x128xf32>
      %34 = arith.mulf %31, %33 : vector<2x128xf32>
      %35 = arith.truncf %34 : vector<2x128xf32> to vector<2x128xbf16>
      %c0_22 = arith.constant 0 : index
      %c0_23 = arith.constant 0 : index
      %36 = vector.load %arg7[%c0_22, %c0_23] : memref<2x128xbf16, #tpu.memory_space<vmem>>, vector<2x128xbf16>
      tpu.vector_store %arg7[%c0_22, %c0_23], %35 {strides = array<i32>} : memref<2x128xbf16, #tpu.memory_space<vmem>>, vector<2x128xbf16>,
      %cst_24 = arith.constant 0.000000e+00 : f32
      %37 = vector.broadcast %cst_24 : f32 to vector<2x128xf32>
      %c0_25 = arith.constant 0 : index
      %c0_26 = arith.constant 0 : index
      %38 = vector.load %arg6[%c0_25, %c0_26] : memref<2x128xf32, #tpu.memory_space<vmem>>, vector<2x128xf32>
      tpu.vector_store %arg6[%c0_25, %c0_26], %37 {strides = array<i32>} : memref<2x128xf32, #tpu.memory_space<vmem>>, vector<2x128xf32>,
    } else {
    }
    %c0 = arith.constant 0 : index
    %c0_1 = arith.constant 0 : index
    %3 = vector.load %arg7[%c0, %c0_1] : memref<2x128xbf16, #tpu.memory_space<vmem>>, vector<2x128xbf16>
    %c0_2 = arith.constant 0 : index
    %c0_3 = arith.constant 0 : index
    %4 = vector.load %arg3[%c0_2, %c0_3] : memref<128x128xbf16, #tpu.memory_space<vmem>>, vector<128x128xbf16>
    %cst = arith.constant dense<0.000000e+00> : vector<2x128xf32>
    %5 = tpu.matmul %3, %4, %cst {dimension_numbers = #tpu.dot_dimension_numbers<[1], [0], [0], [1], [0, 0, 1, 1], [], []>} : vector<2x128xbf16>, vector<128x128xbf16>, vector<2x128xf32> -> vector<2x128xf32>
    %c0_4 = arith.constant 0 : index
    %c0_5 = arith.constant 0 : index
    %6 = vector.load %arg4[%c0_4, %c0_5] : memref<128x128xbf16, #tpu.memory_space<vmem>>, vector<128x128xbf16>
    %cst_6 = arith.constant dense<0.000000e+00> : vector<2x128xf32>
    %7 = tpu.matmul %3, %6, %cst_6 {dimension_numbers = #tpu.dot_dimension_numbers<[1], [0], [0], [1], [0, 0, 1, 1], [], []>} : vector<2x128xbf16>, vector<128x128xbf16>, vector<2x128xf32> -> vector<2x128xf32>
    %8 = arith.negf %5 : vector<2x128xf32>
    %9 = math.exp %8 : vector<2x128xf32>
    %cst_7 = arith.constant 1.000000e+00 : f32
    %10 = vector.broadcast %cst_7 : f32 to vector<2x128xf32>
    %11 = arith.addf %10, %9 : vector<2x128xf32>
    %12 = arith.divf %10, %11 : vector<2x128xf32>
    %13 = arith.mulf %5, %12 : vector<2x128xf32>
    %14 = arith.mulf %13, %7 : vector<2x128xf32>
    %c0_8 = arith.constant 0 : index
    %c0_9 = arith.constant 0 : index
    %15 = vector.load %arg6[%c0_8, %c0_9] : memref<2x128xf32, #tpu.memory_space<vmem>>, vector<2x128xf32>
    %16 = arith.truncf %14 : vector<2x128xf32> to vector<2x128xbf16>
    %c0_10 = arith.constant 0 : index
    %c0_11 = arith.constant 0 : index
    %17 = vector.load %arg5[%c0_10, %c0_11] : memref<128x128xbf16, #tpu.memory_space<vmem>>, vector<128x128xbf16>
    %cst_12 = arith.constant dense<0.000000e+00> : vector<2x128xf32>
    %18 = tpu.matmul %16, %17, %cst_12 {dimension_numbers = #tpu.dot_dimension_numbers<[1], [0], [0], [1], [0, 0, 1, 1], [], []>} : vector<2x128xbf16>, vector<128x128xbf16>, vector<2x128xf32> -> vector<2x128xf32>
    %19 = arith.addf %15, %18 : vector<2x128xf32>
    %c0_13 = arith.constant 0 : index
    %c0_14 = arith.constant 0 : index
    %20 = vector.load %arg6[%c0_13, %c0_14] : memref<2x128xf32, #tpu.memory_space<vmem>>, vector<2x128xf32>
    tpu.vector_store %arg6[%c0_13, %c0_14], %19 {strides = array<i32>} : memref<2x128xf32, #tpu.memory_space<vmem>>, vector<2x128xf32>,
    return
  }
  func.func @transform_0(%arg0: i32) -> (i32, i32) {
    %c0_i32 = arith.constant 0 : i32
    %c0_i32_0 = arith.constant 0 : i32
    %c0_i32_1 = arith.constant 0 : i32
    return %c0_i32, %c0_i32_0 : i32, i32
  }
  func.func @transform_1(%arg0: i32) -> (i32, i32) {
    %c0_i32 = arith.constant 0 : i32
    %c0_i32_0 = arith.constant 0 : i32
    %c0_i32_1 = arith.constant 0 : i32
    return %c0_i32, %c0_i32_0 : i32, i32
  }
  func.func @transform_2(%arg0: i32) -> (i32, i32) {
    %c0_i32 = arith.constant 0 : i32
    %c0_i32_0 = arith.constant 0 : i32
    return %c0_i32, %arg0 : i32, i32
  }
  func.func @transform_3(%arg0: i32) -> (i32, i32) {
    %c0_i32 = arith.constant 0 : i32
    %c0_i32_0 = arith.constant 0 : i32
    return %c0_i32, %arg0 : i32, i32
  }
  func.func @transform_4(%arg0: i32) -> (i32, i32) {
    %c0_i32 = arith.constant 0 : i32
    %c0_i32_0 = arith.constant 0 : i32
    return %arg0, %c0_i32 : i32, i32
  }
  func.func @transform_5(%arg0: i32) -> (i32, i32) {
    %c0_i32 = arith.constant 0 : i32
    %c0_i32_0 = arith.constant 0 : i32
    %c0_i32_1 = arith.constant 0 : i32
    return %c0_i32, %c0_i32_0 : i32, i32
  }
}

</mosaic_0001>

<llo_original>
// kernel: fwd.9
$region0: #{fwd.9}
  #allocation0 [shape = 'u32[]', space=smem, size = 0x4, offset = 0x4, fixed_abs, tag = 'smem constant byte address 0x4 - core index']
  #allocation1 [shape = 'u32[144,128]{1,0:T(1,128)}', space=vmem, size = 0x12000, scoped, tag = 'internal scratch']
  %s0 = inlined_call_operand.vmem [shape: f32[2,128], index: 0, kind: input, shape index: {}]
  %s1 = inlined_call_operand.vmem [shape: f32[1,128], index: 1, kind: input, shape index: {}]
  %s2 = inlined_call_operand.hbm [shape: bf16[128,256], index: 2, kind: input, shape index: {}]
  %s3 = inlined_call_operand.vmem [shape: f32[2,256], index: 3, kind: output, shape index: {}]
  %s4 = sld [smem:[#allocation0]]
  $region26: #{fwd.9} parent=0
    _
  %s6 = ssub.s32 1, %s4
  %s7 = scalar_select 0, %s6, %s4
  $region1: #{fwd.9} parent=0
    #allocation2 [shape = 'u8[65536]{0}', space=vmem, size = 0x10000, scoped, tag = 'input window, operand 2, single buffered']
    #allocation3 [shape = 's32[1]{0}', space=sflag, size = 0x4, scoped, tag = 'scoped memory for fwd.9']
    %8 = vsyncpa [#allocation3], 0
    // Predicated region
    $region2: #{fwd.9} parent=1 // pred_check
      _
    $region3: #{fwd.9} parent=1 // pred_check_branch
      %10 = sbr.rel (0) target = $region5
    $region4: #{fwd.9} parent=1 // pred_region
      _
    $region5: #{fwd.9} parent=1 // pred_fallthru
      _
    // Predicated region
    $region6: #{fwd.9} parent=1 // pred_check
      _
    $region7: #{fwd.9} parent=1 // pred_check_branch
      %12 = sbr.rel (0) target = $region9
    $region8: #{fwd.9} parent=1 // pred_region
      _
    $region9: #{fwd.9} parent=1 // pred_fallthru
      _
    // Predicated region
    $region10: #{fwd.9} parent=1 // pred_check
      _
    $region11: #{fwd.9} parent=1 // pred_check_branch
      %14 = sbr.rel (0) target = $region13
    $region12: #{fwd.9} parent=1 // pred_region
      %s16 = ssub.s32 2048, 2048
      %17 = vsyncadd [#allocation3], %s16
      %s18 = sshll.u32 [#allocation2], 4
      %s19 = int_to_ptr.vmem [resolvable:$true] %s18
      %24 = dma.hbm_to_vmem [thread:$0]  %s2, 2048, %s19, [#allocation3], 128, 128, 8
    $region13: #{fwd.9} parent=1 // pred_fallthru
      _
    // Predicated region
    $region14: #{fwd.9} parent=1 // pred_check
      _
    $region15: #{fwd.9} parent=1 // pred_check_branch
      %26 = sbr.rel (0) target = $region17
    $region16: #{fwd.9} parent=1 // pred_region
      %27 = dma.done [#allocation3], 2048
    $region17: #{fwd.9} parent=1 // pred_fallthru
      _
    %v29 = vld [vmem:[%s0] sm:$0x3]
    %v30 = vmul.f32 %v29, %v29
    %vm31 = vcmask 1041408
    %v32 = vsel %vm31, %v30, 0.0
    %33 = vadd.xlane.f32.xlu0 %v32
    %v34 = vpop.xlane.xlu0 %33
    %v35 = vrcp.pop 128.0
    %v36 = vmul.f32 %v34, %v35
    %v37 = vadd.f32 %v36, 1e-05
    %v38 = vrsqrt.pop %v37
    %v39 = vmul.f32 %v29, %v38
    %v40 = vld [vmem:[%s1] sm:$0x1]
    %v42 = vlaneseq
    %v43 = vshrl.u32 %v42, 7
    %v44 = vsub.s32 0, %v43
    %v45 = vrot.slane %v40, %v44
    %v47 = vmul.f32 %v39, %v45
    %v48 = vpack.c.bf16 %v47, %v47
    %v49 = vld [vmem:[#allocation2] sm:$0xff]
    %v50 = vld [vmem:[#allocation2 + $0x8] sm:$0xff]
    %v51 = vld [vmem:[#allocation2 + $0x10] sm:$0xff]
    %v52 = vld [vmem:[#allocation2 + $0x18] sm:$0xff]
    %v53 = vld [vmem:[#allocation2 + $0x20] sm:$0xff]
    %v54 = vld [vmem:[#allocation2 + $0x28] sm:$0xff]
    %v55 = vld [vmem:[#allocation2 + $0x30] sm:$0xff]
    %v56 = vld [vmem:[#allocation2 + $0x38] sm:$0xff]
    %v57 = vld [vmem:[#allocation2 + $0x40] sm:$0xff]
    %v58 = vld [vmem:[#allocation2 + $0x48] sm:$0xff]
    %v59 = vld [vmem:[#allocation2 + $0x50] sm:$0xff]
    %v60 = vld [vmem:[#allocation2 + $0x58] sm:$0xff]
    %v61 = vld [vmem:[#allocation2 + $0x60] sm:$0xff]
    %v62 = vld [vmem:[#allocation2 + $0x68] sm:$0xff]
    %v63 = vld [vmem:[#allocation2 + $0x70] sm:$0xff]
    %v64 = vld [vmem:[#allocation2 + $0x78] sm:$0xff]
    %v81 = vunpack.c.l.b16 %v49
    %v82 = vunpack.c.h.b16 %v49
    %v83 = vunpack.c.l.b16 %v50
    %v84 = vunpack.c.h.b16 %v50
    %v85 = vunpack.c.l.b16 %v51
    %v86 = vunpack.c.h.b16 %v51
    %v87 = vunpack.c.l.b16 %v52
    %v88 = vunpack.c.h.b16 %v52
    %v89 = vunpack.c.l.b16 %v53
    %v90 = vunpack.c.h.b16 %v53
    %v91 = vunpack.c.l.b16 %v54
    %v92 = vunpack.c.h.b16 %v54
    %v93 = vunpack.c.l.b16 %v55
    %v94 = vunpack.c.h.b16 %v55
    %v95 = vunpack.c.l.b16 %v56
    %v96 = vunpack.c.h.b16 %v56
    %v97 = vunpack.c.l.b16 %v57
    %v98 = vunpack.c.h.b16 %v57
    %v99 = vunpack.c.l.b16 %v58
    %v100 = vunpack.c.h.b16 %v58
    %v101 = vunpack.c.l.b16 %v59
    %v102 = vunpack.c.h.b16 %v59
    %v103 = vunpack.c.l.b16 %v60
    %v104 = vunpack.c.h.b16 %v60
    %v105 = vunpack.c.l.b16 %v61
    %v106 = vunpack.c.h.b16 %v61
    %v107 = vunpack.c.l.b16 %v62
    %v108 = vunpack.c.h.b16 %v62
    %v109 = vunpack.c.l.b16 %v63
    %v110 = vunpack.c.h.b16 %v63
    %v111 = vunpack.c.l.b16 %v64
    %v112 = vunpack.c.h.b16 %v64
    %v113 = vpack.c.b16 %v83, %v81
    %v114 = vpack.c.b16 %v84, %v82
    %v115 = vpack.c.b16 %v87, %v85
    %v116 = vpack.c.b16 %v88, %v86
    %v117 = vpack.c.b16 %v91, %v89
    %v118 = vpack.c.b16 %v92, %v90
    %v119 = vpack.c.b16 %v95, %v93
    %v120 = vpack.c.b16 %v96, %v94
    %v121 = vpack.c.b16 %v99, %v97
    %v122 = vpack.c.b16 %v100, %v98
    %v123 = vpack.c.b16 %v103, %v101
    %v124 = vpack.c.b16 %v104, %v102
    %v125 = vpack.c.b16 %v107, %v105
    %v126 = vpack.c.b16 %v108, %v106
    %v127 = vpack.c.b16 %v111, %v109
    %v128 = vpack.c.b16 %v112, %v110
    %145 = vmatprep.subr.bf16.mxu0 %v128
    %146 = vmatpush1.bf16.msra.mxu0 %v127
    %147 = vmatprep.subr.bf16.mxu0 %v126
    %148 = vmatpush1.bf16.msra.mxu0 %v125
    %149 = vmatprep.subr.bf16.mxu0 %v124
    %150 = vmatpush1.bf16.msra.mxu0 %v123
    %151 = vmatprep.subr.bf16.mxu0 %v122
    %152 = vmatpush1.bf16.msra.mxu0 %v121
    %153 = vmatprep.subr.bf16.mxu0 %v120
    %154 = vmatpush1.bf16.msra.mxu0 %v119
    %155 = vmatprep.subr.bf16.mxu0 %v118
    %156 = vmatpush1.bf16.msra.mxu0 %v117
    %157 = vmatprep.subr.bf16.mxu0 %v116
    %158 = vmatpush1.bf16.msra.mxu0 %v115
    %159 = vmatprep.subr.bf16.mxu0 %v114
    %160 = vmatpush1.bf16.msra.mxu0 %v113
    %161 = vmatprep.subr.bf16.mxu0 0
    %162 = vmatpush2.bf16.msra.mxu0 0
    %163 = vmatprep.subr.bf16.mxu0 0
    %164 = vmatpush2.bf16.msra.mxu0 0
    %165 = vmatprep.subr.bf16.mxu0 0
    %166 = vmatpush2.bf16.msra.mxu0 0
    %167 = vmatprep.subr.bf16.mxu0 0
    %168 = vmatpush2.bf16.msra.mxu0 0
    %169 = vmatprep.subr.bf16.mxu0 0
    %170 = vmatpush2.bf16.msra.mxu0 0
    %171 = vmatprep.subr.bf16.mxu0 0
    %172 = vmatpush2.bf16.msra.mxu0 0
    %173 = vmatprep.subr.bf16.mxu0 0
    %174 = vmatpush2.bf16.msra.mxu0 0
    %175 = vmatprep.subr.bf16.mxu0 0
    %176 = vmatpush2.bf16.msra.mxu0 0
    %177 = vmatprep.mubr.bf16.mxu0 0
    %178 = vmatmul.mubr.bf16.gmra.mxu0 %v48
    %v179 = vpop.f32.mrf.mxu0
    %v180 = vadd.f32 0.0, %v179
    %v181 = vpop.f32.mrf.mxu0
    %v182 = vadd.f32 0.0, %v181
    %v183 = vpop.f32.mrf.mxu0
    %v184 = vpop.f32.mrf.mxu0
    %185 = vdwg.mxu0
    %v188 = vcombine.low %v180, %v182
    %v190 = vunpack.c.l.s4 1983009808
    %v191 = vunpack.c.0.s8 %v190
    %v192 = vlaneseq
    %v193 = vshrl.u32 %v192, 7
    %v194 = vsub.s32 %v191, %v193
    %v195 = vrot.slane %v188, %v194
    %197 = vst [vmem:[%s3] sm:$0xf] %v195
    // Predicated region
    $region18: #{fwd.9} parent=1 // pred_check
      _
    $region19: #{fwd.9} parent=1 // pred_check_branch
      %199 = sbr.rel (0) target = $region21
    $region20: #{fwd.9} parent=1 // pred_region
      _
    $region21: #{fwd.9} parent=1 // pred_fallthru
      _
    // Predicated region
    $region22: #{fwd.9} parent=1 // pred_check
      _
    $region23: #{fwd.9} parent=1 // pred_check_branch
      %201 = sbr.rel (0) target = $region25
    $region24: #{fwd.9} parent=1 // pred_region
      _
    $region25: #{fwd.9} parent=1 // pred_fallthru
      _
    %202 = vsyncpa [#allocation3], 1

// kernel: fwd.10
$region0: #{fwd.10}
  #allocation0 [shape = 'u32[]', space=smem, size = 0x4, offset = 0x4, fixed_abs, tag = 'smem constant byte address 0x4 - core index']
  #allocation1 [shape = 'u32[144,128]{1,0:T(1,128)}', space=vmem, size = 0x12000, scoped, tag = 'internal scratch']
  %s0 = inlined_call_operand.vmem [shape: f32[2,2,2,32], index: 0, kind: input, shape index: {}]
  %s1 = inlined_call_operand.vmem [shape: f32[2,2,4,32], index: 1, kind: input, shape index: {}]
  %s2 = inlined_call_operand.vmem [shape: f32[2,2,4,32], index: 2, kind: input, shape index: {}]
  %s3 = inlined_call_operand.vmem [shape: f32[2,2,2,32], index: 3, kind: output, shape index: {}]
  %s4 = sld [smem:[#allocation0]]
  $region45: #{fwd.10} parent=0
    _
  %s6 = ssub.s32 1, %s4
  %s7 = scalar_select 0, %s6, %s4
  loop: start=0, step=1, limit=6
  $region2: #{fwd.10} parent=0 // loop_pre_header
    _
  $region3: #{fwd.10} parent=0 // loop_header
    %s9 = sphi 0, %s13
    %p10 = scmp.ge.s32.totalorder %s9, 6
    %s16 = sphi 0, %s28
    %s17 = sphi 0, %s24
    %s18 = sphi 0, %s16
    %s19 = sphi 0, %s17
    %s20 = sphi 0, %s18
    %s21 = sphi 0, %s19
    %s33 = sphi 0, %s35
    %s36 = sphi 0, %s33
    %s37 = sphi 0, %s36
    %s53 = sphi 0, %s37
    %s61 = sphi 0, %s63
    %s64 = sphi 0, %s61
    %s65 = sphi 0, %s64
    %s81 = sphi 0, %s65
    %s89 = sphi 0, %s91
    %s92 = sphi 0, %s89
    %s93 = sphi 0, %s92
    %s109 = sphi 0, %s93
    %s117 = sphi 0, %s119
    %s120 = sphi 0, %s117
    %s121 = sphi 0, %s120
    %s137 = sphi 0, %s121
  $region4: #{fwd.10} parent=0 // loop_header_branch
    %12 = sbr.rel (%p10) target = $region8
  $region5: #{fwd.10} parent=0 // loop_body
    %s14 = ssub.s32 %s9, 1
    %s15 = ssub.s32 %s9, 2
    %s22 = sadd.s32 1, %s17
    %p23 = scmp.ge.s32.totalorder %s22, 2
    %s24 = scalar_select %p23, 0, %s22
    %s25 = sadd.s32 1, %s16
    %s26 = scalar_select %p23, %s25, %s16
    %p27 = scmp.ge.s32.totalorder %s26, 2
    %s28 = scalar_select %p27, 0, %s26
    %s29 = ssub.s32 %s16, %s28
    %s30 = ssub.s32 %s17, %s24
    %s31 = sor.u32 %s29, %s30
    %p32 = scmp.eq.s32.totalorder %s31, 0
    %s34 = sadd.s32 %s33, 1
    %s35 = scalar_select %p32, %s33, %s34
    %p38 = pneg %p32
    %p39 = scmp.eq.s32.totalorder %s9, 3
    %p40 = por %p38, %p39
    %p41 = scmp.ne.s32.totalorder %s33, %s36
    %p42 = scmp.eq.s32.totalorder %s9, 0
    %p43 = por %p41, %p42
    %p44 = scmp.ne.s32.totalorder %s33, %s36
    %p45 = scmp.eq.s32.totalorder %s14, 3
    %p46 = por %p44, %p45
    %p47 = scmp.ne.s32.totalorder %s36, %s37
    %p48 = scmp.eq.s32.totalorder %s14, 0
    %p49 = por %p47, %p48
    %p50 = scmp.ne.s32.totalorder %s36, %s37
    %p51 = scmp.eq.s32.totalorder %s15, 3
    %p52 = por %p50, %p51
    %p54 = scmp.ne.s32.totalorder %s37, %s53
    %p55 = scmp.eq.s32.totalorder %s15, 0
    %p56 = por %p54, %p55
    %s57 = ssub.s32 %s16, %s28
    %s58 = ssub.s32 %s17, %s24
    %s59 = sor.u32 %s57, %s58
    %p60 = scmp.eq.s32.totalorder %s59, 0
    %s62 = sadd.s32 %s61, 1
    %s63 = scalar_select %p60, %s61, %s62
    %p66 = pneg %p60
    %p67 = scmp.eq.s32.totalorder %s9, 3
    %p68 = por %p66, %p67
    %p69 = scmp.ne.s32.totalorder %s61, %s64
    %p70 = scmp.eq.s32.totalorder %s9, 0
    %p71 = por %p69, %p70
    %p72 = scmp.ne.s32.totalorder %s61, %s64
    %p73 = scmp.eq.s32.totalorder %s14, 3
    %p74 = por %p72, %p73
    %p75 = scmp.ne.s32.totalorder %s64, %s65
    %p76 = scmp.eq.s32.totalorder %s14, 0
    %p77 = por %p75, %p76
    %p78 = scmp.ne.s32.totalorder %s64, %s65
    %p79 = scmp.eq.s32.totalorder %s15, 3
    %p80 = por %p78, %p79
    %p82 = scmp.ne.s32.totalorder %s65, %s81
    %p83 = scmp.eq.s32.totalorder %s15, 0
    %p84 = por %p82, %p83
    %s85 = ssub.s32 %s16, %s28
    %s86 = ssub.s32 %s17, %s24
    %s87 = sor.u32 %s85, %s86
    %p88 = scmp.eq.s32.totalorder %s87, 0
    %s90 = sadd.s32 %s89, 1
    %s91 = scalar_select %p88, %s89, %s90
    %p94 = pneg %p88
    %p95 = scmp.eq.s32.totalorder %s9, 3
    %p96 = por %p94, %p95
    %p97 = scmp.ne.s32.totalorder %s89, %s92
    %p98 = scmp.eq.s32.totalorder %s9, 0
    %p99 = por %p97, %p98
    %p100 = scmp.ne.s32.totalorder %s89, %s92
    %p101 = scmp.eq.s32.totalorder %s14, 3
    %p102 = por %p100, %p101
    %p103 = scmp.ne.s32.totalorder %s92, %s93
    %p104 = scmp.eq.s32.totalorder %s14, 0
    %p105 = por %p103, %p104
    %p106 = scmp.ne.s32.totalorder %s92, %s93
    %p107 = scmp.eq.s32.totalorder %s15, 3
    %p108 = por %p106, %p107
    %p110 = scmp.ne.s32.totalorder %s93, %s109
    %p111 = scmp.eq.s32.totalorder %s15, 0
    %p112 = por %p110, %p111
    %s113 = ssub.s32 %s16, %s28
    %s114 = ssub.s32 %s17, %s24
    %s115 = sor.u32 %s113, %s114
    %p116 = scmp.eq.s32.totalorder %s115, 0
    %s118 = sadd.s32 %s117, 1
    %s119 = scalar_select %p116, %s117, %s118
    %p122 = pneg %p116
    %p123 = scmp.eq.s32.totalorder %s9, 3
    %p124 = por %p122, %p123
    %p125 = scmp.ne.s32.totalorder %s117, %s120
    %p126 = scmp.eq.s32.totalorder %s9, 0
    %p127 = por %p125, %p126
    %p128 = scmp.ne.s32.totalorder %s117, %s120
    %p129 = scmp.eq.s32.totalorder %s14, 3
    %p130 = por %p128, %p129
    %p131 = scmp.ne.s32.totalorder %s120, %s121
    %p132 = scmp.eq.s32.totalorder %s14, 0
    %p133 = por %p131, %p132
    %p134 = scmp.ne.s32.totalorder %s120, %s121
    %p135 = scmp.eq.s32.totalorder %s15, 3
    %p136 = por %p134, %p135
    %p138 = scmp.ne.s32.totalorder %s121, %s137
    %p139 = scmp.eq.s32.totalorder %s15, 0
    %p140 = por %p138, %p139
    %p141 = scmp.le.s32.totalorder 1, %s9
    %p142 = scmp.lt.s32.totalorder %s9, 5
    %p143 = pnand %p141, %p142
    %p144 = pneg %p143
    // Predicated region
    $region9: #{fwd.10} parent=5 // pred_check
      _
    $region10: #{fwd.10} parent=5 // pred_check_branch
      %146 = sbr.rel (%p143) target = $region12
    $region11: #{fwd.10} parent=5 // pred_region
      %s147 = ssub.s32 %s9, 1
    $region12: #{fwd.10} parent=5 // pred_fallthru
      _
    %p148 = scmp.lt.s32.totalorder %s9, 4
    // Predicated region
    $region13: #{fwd.10} parent=5 // pred_check
      %p149 = pneg %p148
    $region14: #{fwd.10} parent=5 // pred_check_branch
      %151 = sbr.rel (%p149) target = $region16
    $region15: #{fwd.10} parent=5 // pred_region
      // Predicated region
      $region17: #{fwd.10} parent=15 // pred_check
        %p152 = pneg %p43
      $region18: #{fwd.10} parent=15 // pred_check_branch
        %154 = sbr.rel (%p152) target = $region20
      $region19: #{fwd.10} parent=15 // pred_region
        %p155 = scmp.lt.s32.totalorder %s16, 1
        %s156 = scalar_select %p155, %s16, 1
        %p157 = scmp.lt.s32.totalorder %s17, 1
        %s158 = scalar_select %p157, %s17, 1
        %s159 = smul.addr %s156, 2
        %s160 = sadd.s32 %s158, %s159
        %s161 = smul.addr %s160, 2
        %s162 = scalar_lea.vmem %s0, %s161
      $region20: #{fwd.10} parent=15 // pred_fallthru
        _
      // Predicated region
      $region21: #{fwd.10} parent=15 // pred_check
        %p163 = pneg %p71
      $region22: #{fwd.10} parent=15 // pred_check_branch
        %165 = sbr.rel (%p163) target = $region24
      $region23: #{fwd.10} parent=15 // pred_region
        %p166 = scmp.lt.s32.totalorder %s16, 1
        %s167 = scalar_select %p166, %s16, 1
        %p168 = scmp.lt.s32.totalorder %s17, 1
        %s169 = scalar_select %p168, %s17, 1
        %s170 = smul.addr %s167, 2
        %s171 = sadd.s32 %s169, %s170
        %s172 = smul.addr %s171, 4
        %s173 = scalar_lea.vmem %s1, %s172
      $region24: #{fwd.10} parent=15 // pred_fallthru
        _
      // Predicated region
      $region25: #{fwd.10} parent=15 // pred_check
        %p174 = pneg %p99
      $region26: #{fwd.10} parent=15 // pred_check_branch
        %176 = sbr.rel (%p174) target = $region28
      $region27: #{fwd.10} parent=15 // pred_region
        %p177 = scmp.lt.s32.totalorder %s16, 1
        %s178 = scalar_select %p177, %s16, 1
        %p179 = scmp.lt.s32.totalorder %s17, 1
        %s180 = scalar_select %p179, %s17, 1
        %s181 = smul.addr %s178, 2
        %s182 = sadd.s32 %s180, %s181
        %s183 = smul.addr %s182, 4
        %s184 = scalar_lea.vmem %s2, %s183
      $region28: #{fwd.10} parent=15 // pred_fallthru
        _
    $region16: #{fwd.10} parent=5 // pred_fallthru
      _
    %p185 = scmp.le.s32.totalorder 1, %s9
    %p186 = scmp.lt.s32.totalorder %s9, 5
    %p187 = pnand %p185, %p186
    %p188 = pneg %p187
    // Predicated region
    $region29: #{fwd.10} parent=5 // pred_check
      _
    $region30: #{fwd.10} parent=5 // pred_check_branch
      %190 = sbr.rel (%p187) target = $region32
    $region31: #{fwd.10} parent=5 // pred_region
      %s191 = ssub.s32 %s9, 1
      %p192 = scmp.lt.s32.totalorder %s18, 1
      %s193 = scalar_select %p192, %s18, 1
      %p194 = scmp.lt.s32.totalorder %s19, 1
      %s195 = scalar_select %p194, %s19, 1
      %s196 = smul.addr %s193, 2
      %s197 = sadd.s32 %s195, %s196
      %s198 = smul.addr %s197, 2
      %s199 = scalar_lea.vmem %s0, %s198
      %p200 = pneg %p49
      %p201 = pneg %p46
      %p202 = scmp.lt.s32.totalorder %s18, 1
      %s203 = scalar_select %p202, %s18, 1
      %p204 = scmp.lt.s32.totalorder %s19, 1
      %s205 = scalar_select %p204, %s19, 1
      %s206 = smul.addr %s203, 2
      %s207 = sadd.s32 %s205, %s206
      %s208 = smul.addr %s207, 4
      %s209 = scalar_lea.vmem %s1, %s208
      %p210 = pneg %p77
      %p211 = pneg %p74
      %p212 = scmp.lt.s32.totalorder %s18, 1
      %s213 = scalar_select %p212, %s18, 1
      %p214 = scmp.lt.s32.totalorder %s19, 1
      %s215 = scalar_select %p214, %s19, 1
      %s216 = smul.addr %s213, 2
      %s217 = sadd.s32 %s215, %s216
      %s218 = smul.addr %s217, 4
      %s219 = scalar_lea.vmem %s2, %s218
      %p220 = pneg %p105
      %p221 = pneg %p102
      %p222 = pneg %p133
      %p223 = pneg %p130
      %p224 = scmp.lt.s32.totalorder %s18, 1
      %s225 = scalar_select %p224, %s18, 1
      %p226 = scmp.lt.s32.totalorder %s19, 1
      %s227 = scalar_select %p226, %s19, 1
      %s228 = smul.addr %s225, 2
      %s229 = sadd.s32 %s227, %s228
      %s230 = smul.addr %s229, 2
      %s231 = scalar_lea.vmem %s3, %s230
      %p232 = scmp.lt.s32.totalorder %s18, 1
      %s233 = scalar_select %p232, %s18, 1
      %p234 = scmp.lt.s32.totalorder %s19, 1
      %s235 = scalar_select %p234, %s19, 1
      %s236 = smul.addr %s233, 2
      %s237 = sadd.s32 %s235, %s236
      %s238 = smul.addr %s237, 2
      %s239 = scalar_lea.vmem %s0, %s238
      %p240 = scmp.lt.s32.totalorder %s18, 1
      %s241 = scalar_select %p240, %s18, 1
      %p242 = scmp.lt.s32.totalorder %s19, 1
      %s243 = scalar_select %p242, %s19, 1
      %s244 = smul.addr %s241, 2
      %s245 = sadd.s32 %s243, %s244
      %s246 = smul.addr %s245, 4
      %s247 = scalar_lea.vmem %s1, %s246
      %p248 = scmp.lt.s32.totalorder %s18, 1
      %s249 = scalar_select %p248, %s18, 1
      %p250 = scmp.lt.s32.totalorder %s19, 1
      %s251 = scalar_select %p250, %s19, 1
      %s252 = smul.addr %s249, 2
      %s253 = sadd.s32 %s251, %s252
      %s254 = smul.addr %s253, 4
      %s255 = scalar_lea.vmem %s2, %s254
      %p256 = scmp.lt.s32.totalorder %s18, 1
      %s257 = scalar_select %p256, %s18, 1
      %p258 = scmp.lt.s32.totalorder %s19, 1
      %s259 = scalar_select %p258, %s19, 1
      %s260 = smul.addr %s257, 2
      %s261 = sadd.s32 %s259, %s260
      %s262 = smul.addr %s261, 2
      %s263 = scalar_lea.vmem %s3, %s262
      %v264 = vld [vmem:[%s239] sm:$0x3]
      %v265 = vld [vmem:[%s247] sm:$0xf]
      %vm266 = vcmask 261120
      %v268 = vsel %vm266, %v264, 0
      %v271 = vsel %vm266, %v265, 0
      %273 = vmatprep.subr.mxu0 0.0
      %274 = vmatpush1.xpose.msra.mxu0 0.0
      %275 = vmatprep.subr.mxu0 0.0
      %276 = vmatpush1.xpose.msra.mxu0 0.0
      %277 = vmatprep.subr.mxu0 0.0
      %278 = vmatpush1.xpose.msra.mxu0 0.0
      %279 = vmatprep.subr.mxu0 0.0
      %280 = vmatpush1.xpose.msra.mxu0 0.0
      %281 = vmatprep.subr.mxu0 0.0
      %282 = vmatpush1.xpose.msra.mxu0 0.0
      %283 = vmatprep.subr.mxu0 0.0
      %284 = vmatpush1.xpose.msra.mxu0 0.0
      %285 = vmatprep.subr.mxu0 0.0
      %286 = vmatpush1.xpose.msra.mxu0 0.0
      %287 = vmatprep.subr.mxu0 0.0
      %288 = vmatpush1.xpose.msra.mxu0 0.0
      %289 = vmatprep.subr.mxu0 0.0
      %290 = vmatpush1.xpose.msra.mxu0 0.0
      %291 = vmatprep.subr.mxu0 0.0
      %292 = vmatpush1.xpose.msra.mxu0 0.0
      %293 = vmatprep.subr.mxu0 0.0
      %294 = vmatpush1.xpose.msra.mxu0 0.0
      %295 = vmatprep.subr.mxu0 0.0
      %296 = vmatpush1.xpose.msra.mxu0 0.0
      %297 = vmatprep.subr.mxu0 0.0
      %298 = vmatpush1.xpose.msra.mxu0 0.0
      %299 = vmatprep.subr.mxu0 0.0
      %300 = vmatpush1.xpose.msra.mxu0 0.0
      %301 = vmatprep.subr.mxu0 0.0
      %302 = vmatpush1.xpose.msra.mxu0 0.0
      %303 = vmatprep.subr.mxu0 0.0
      %304 = vmatpush1.xpose.msra.mxu0 %v271
      %305 = vmatprep.subr.mxu0 0.0
      %306 = vmatpush2.xpose.msra.mxu0 0.0
      %307 = vmatprep.subr.mxu0 0.0
      %308 = vmatpush2.xpose.msra.mxu0 0.0
      %309 = vmatprep.subr.mxu0 0.0
      %310 = vmatpush2.xpose.msra.mxu0 0.0
      %311 = vmatprep.subr.mxu0 0.0
      %312 = vmatpush2.xpose.msra.mxu0 0.0
      %313 = vmatprep.subr.mxu0 0.0
      %314 = vmatpush2.xpose.msra.mxu0 0.0
      %315 = vmatprep.subr.mxu0 0.0
      %316 = vmatpush2.xpose.msra.mxu0 0.0
      %317 = vmatprep.subr.mxu0 0.0
      %318 = vmatpush2.xpose.msra.mxu0 0.0
      %319 = vmatprep.subr.mxu0 0.0
      %320 = vmatpush2.xpose.msra.mxu0 0.0
      %321 = vmatprep.subr.mxu0 0.0
      %322 = vmatpush2.xpose.msra.mxu0 0.0
      %323 = vmatprep.subr.mxu0 0.0
      %324 = vmatpush2.xpose.msra.mxu0 0.0
      %325 = vmatprep.subr.mxu0 0.0
      %326 = vmatpush2.xpose.msra.mxu0 0.0
      %327 = vmatprep.subr.mxu0 0.0
      %328 = vmatpush2.xpose.msra.mxu0 0.0
      %329 = vmatprep.subr.mxu0 0.0
      %330 = vmatpush2.xpose.msra.mxu0 0.0
      %331 = vmatprep.subr.mxu0 0.0
      %332 = vmatpush2.xpose.msra.mxu0 0.0
      %333 = vmatprep.subr.mxu0 0.0
      %334 = vmatpush2.xpose.msra.mxu0 0.0
      %335 = vmatprep.subr.mxu0 0.0
      %336 = vmatpush2.xpose.msra.mxu0 0.0
      %337 = vmatprep.mubr.f32.mxu0 0.0
      %338 = vmatmul.mubr.f32.gmra.mxu0 %v268
      %v339 = vpop.f32.mrf.mxu0
      %v340 = vadd.f32 0.0, %v339
      %v341 = vpop.f32.mrf.mxu0
      %342 = vdwg.mxu0
      %v343 = vmul.f32 %v340, 0.17677669
      %vm344 = vcmask 25600
      %v345 = vsel %vm344, %v343, -inf
      %346 = vmax.xlane.f32.xlu0 %v345
      %v347 = vpop.xlane.xlu0 %346
      %v348 = vsub.f32 %v343, %v347
      %v349 = vmul.f32 %v348, 1.442695
      %v350 = vpow.pop %v349
      %v351 = vsel %vm344, %v350, 0.0
      %352 = vadd.xlane.f32.xlu0 %v351
      %v353 = vpop.xlane.xlu0 %352
      %v354 = vrcp.pop %v353
      %v355 = vmul.f32 %v350, %v354
      %v356 = vld [vmem:[%s255] sm:$0xf]
      %vm357 = vcmask 31744
      %v359 = vsel %vm357, %v355, 0
      %vm361 = vcmask 1043456
      %v363 = vsel %vm361, %v356, 0
      %365 = vmatprep.subr.mxu0 0.0
      %366 = vmatpush1.msra.mxu0 0.0
      %367 = vmatprep.subr.mxu0 0.0
      %368 = vmatpush1.msra.mxu0 0.0
      %369 = vmatprep.subr.mxu0 0.0
      %370 = vmatpush1.msra.mxu0 0.0
      %371 = vmatprep.subr.mxu0 0.0
      %372 = vmatpush1.msra.mxu0 0.0
      %373 = vmatprep.subr.mxu0 0.0
      %374 = vmatpush1.msra.mxu0 0.0
      %375 = vmatprep.subr.mxu0 0.0
      %376 = vmatpush1.msra.mxu0 0.0
      %377 = vmatprep.subr.mxu0 0.0
      %378 = vmatpush1.msra.mxu0 0.0
      %379 = vmatprep.subr.mxu0 0.0
      %380 = vmatpush1.msra.mxu0 0.0
      %381 = vmatprep.subr.mxu0 0.0
      %382 = vmatpush1.msra.mxu0 0.0
      %383 = vmatprep.subr.mxu0 0.0
      %384 = vmatpush1.msra.mxu0 0.0
      %385 = vmatprep.subr.mxu0 0.0
      %386 = vmatpush1.msra.mxu0 0.0
      %387 = vmatprep.subr.mxu0 0.0
      %388 = vmatpush1.msra.mxu0 0.0
      %389 = vmatprep.subr.mxu0 0.0
      %390 = vmatpush1.msra.mxu0 0.0
      %391 = vmatprep.subr.mxu0 0.0
      %392 = vmatpush1.msra.mxu0 0.0
      %393 = vmatprep.subr.mxu0 0.0
      %394 = vmatpush1.msra.mxu0 0.0
      %395 = vmatprep.subr.mxu0 0.0
      %396 = vmatpush1.msra.mxu0 %v363
      %397 = vmatprep.subr.mxu0 0.0
      %398 = vmatpush2.msra.mxu0 0.0
      %399 = vmatprep.subr.mxu0 0.0
      %400 = vmatpush2.msra.mxu0 0.0
      %401 = vmatprep.subr.mxu0 0.0
      %402 = vmatpush2.msra.mxu0 0.0
      %403 = vmatprep.subr.mxu0 0.0
      %404 = vmatpush2.msra.mxu0 0.0
      %405 = vmatprep.subr.mxu0 0.0
      %406 = vmatpush2.msra.mxu0 0.0
      %407 = vmatprep.subr.mxu0 0.0
      %408 = vmatpush2.msra.mxu0 0.0
      %409 = vmatprep.subr.mxu0 0.0
      %410 = vmatpush2.msra.mxu0 0.0
      %411 = vmatprep.subr.mxu0 0.0
      %412 = vmatpush2.msra.mxu0 0.0
      %413 = vmatprep.subr.mxu0 0.0
      %414 = vmatpush2.msra.mxu0 0.0
      %415 = vmatprep.subr.mxu0 0.0
      %416 = vmatpush2.msra.mxu0 0.0
      %417 = vmatprep.subr.mxu0 0.0
      %418 = vmatpush2.msra.mxu0 0.0
      %419 = vmatprep.subr.mxu0 0.0
      %420 = vmatpush2.msra.mxu0 0.0
      %421 = vmatprep.subr.mxu0 0.0
      %422 = vmatpush2.msra.mxu0 0.0
      %423 = vmatprep.subr.mxu0 0.0
      %424 = vmatpush2.msra.mxu0 0.0
      %425 = vmatprep.subr.mxu0 0.0
      %426 = vmatpush2.msra.mxu0 0.0
      %427 = vmatprep.subr.mxu0 0.0
      %428 = vmatpush2.msra.mxu0 0.0
      %429 = vmatprep.mubr.f32.mxu0 0.0
      %430 = vmatmul.mubr.f32.gmra.mxu0 %v359
      %v431 = vpop.f32.mrf.mxu0
      %v432 = vadd.f32 0.0, %v431
      %v433 = vpop.f32.mrf.mxu0
      %434 = vdwg.mxu0
      %vm435 = vcmask 254976
      %436 = vst.msk [vmem:[%s263] sm:$0x3] %vm435, %v432
      %p437 = scmp.lt.s32.totalorder %s18, 1
      %s438 = scalar_select %p437, %s18, 1
      %p439 = scmp.lt.s32.totalorder %s19, 1
      %s440 = scalar_select %p439, %s19, 1
      %s441 = smul.addr %s438, 2
      %s442 = sadd.s32 %s440, %s441
      %s443 = smul.addr %s442, 2
      %s444 = scalar_lea.vmem %s3, %s443
      // Predicated region
      $region33: #{fwd.10} parent=31 // pred_check
        %p445 = pneg %p130
      $region34: #{fwd.10} parent=31 // pred_check_branch
        %447 = sbr.rel (%p445) target = $region36
      $region35: #{fwd.10} parent=31 // pred_region
        _
      $region36: #{fwd.10} parent=31 // pred_fallthru
        _
    $region32: #{fwd.10} parent=5 // pred_fallthru
      _
    %p448 = scmp.le.s32.totalorder 2, %s9
    // Predicated region
    $region37: #{fwd.10} parent=5 // pred_check
      %p449 = pneg %p448
    $region38: #{fwd.10} parent=5 // pred_check_branch
      %451 = sbr.rel (%p449) target = $region40
    $region39: #{fwd.10} parent=5 // pred_region
      %s452 = ssub.s32 %s9, 2
      // Predicated region
      $region41: #{fwd.10} parent=39 // pred_check
        %p453 = pneg %p136
      $region42: #{fwd.10} parent=39 // pred_check_branch
        %455 = sbr.rel (%p453) target = $region44
      $region43: #{fwd.10} parent=39 // pred_region
        %p456 = scmp.lt.s32.totalorder %s20, 1
        %s457 = scalar_select %p456, %s20, 1
        %p458 = scmp.lt.s32.totalorder %s21, 1
        %s459 = scalar_select %p458, %s21, 1
        %s460 = smul.addr %s457, 2
        %s461 = sadd.s32 %s459, %s460
        %s462 = smul.addr %s461, 2
        %s463 = scalar_lea.vmem %s3, %s462
      $region44: #{fwd.10} parent=39 // pred_fallthru
        _
    $region40: #{fwd.10} parent=5 // pred_fallthru
      _
  $region6: #{fwd.10} parent=0 // loop_footer
    %s13 = sadd.s32 1, %s9
  $region7: #{fwd.10} parent=0 // loop_footer_branch
    %8 = sbr.rel target = $region3
  $region8: #{fwd.10} parent=0 // loop_exit
    _

// kernel: fwd.11
$region0: #{fwd.11}
  #allocation0 [shape = 'u32[]', space=smem, size = 0x4, offset = 0x4, fixed_abs, tag = 'smem constant byte address 0x4 - core index']
  #allocation1 [shape = 'u32[144,128]{1,0:T(1,128)}', space=vmem, size = 0x12000, scoped, tag = 'internal scratch']
  #allocation2 [shape = 'f32[2,128]{1,0:T(2,128)}', space=vmem, size = 0x400, scoped, tag = 'scratch operand']
  %s0 = inlined_call_operand.vmem [shape: f32[2,128], index: 0, kind: input, shape index: {}]
  %s1 = inlined_call_operand.vmem [shape: bf16[128,128], index: 1, kind: input, shape index: {}]
  %s2 = inlined_call_operand.vmem [shape: f32[2,128], index: 2, kind: output, shape index: {}]
  %s3 = sld [smem:[#allocation0]]
  $region26: #{fwd.11} parent=0
    _
  %s5 = ssub.s32 1, %s3
  %s6 = scalar_select 0, %s5, %s3
  // Predicated region
  $region2: #{fwd.11} parent=0 // pred_check
    _
  $region3: #{fwd.11} parent=0 // pred_check_branch
    %8 = sbr.rel (0) target = $region5
  $region4: #{fwd.11} parent=0 // pred_region
    _
  $region5: #{fwd.11} parent=0 // pred_fallthru
    _
  // Predicated region
  $region6: #{fwd.11} parent=0 // pred_check
    _
  $region7: #{fwd.11} parent=0 // pred_check_branch
    %10 = sbr.rel (0) target = $region9
  $region8: #{fwd.11} parent=0 // pred_region
    _
  $region9: #{fwd.11} parent=0 // pred_fallthru
    _
  %p12 = scmp.eq.s32.totalorder 0, 0
  // Predicated region
  $region10: #{fwd.11} parent=0 // pred_check
    %p13 = pneg %p12
  $region11: #{fwd.11} parent=0 // pred_check_branch
    %15 = sbr.rel (%p13) target = $region13
  $region12: #{fwd.11} parent=0 // pred_region
    %16 = vst [vmem:[#allocation2] sm:$0x3] 0.0
  $region13: #{fwd.11} parent=0 // pred_fallthru
    _
  %v17 = vld [vmem:[#allocation2] sm:$0x3]
  %v18 = vld [vmem:[%s0] sm:$0x3]
  %v19 = vpack.c.bf16 %v18, %v18
  %v20 = vld [vmem:[%s1] sm:$0xf]
  %v21 = vld [vmem:[%s1 + $0x4] sm:$0xf]
  %v22 = vld [vmem:[%s1 + $0x8] sm:$0xf]
  %v23 = vld [vmem:[%s1 + $0xc] sm:$0xf]
  %v24 = vld [vmem:[%s1 + $0x10] sm:$0xf]
  %v25 = vld [vmem:[%s1 + $0x14] sm:$0xf]
  %v26 = vld [vmem:[%s1 + $0x18] sm:$0xf]
  %v27 = vld [vmem:[%s1 + $0x1c] sm:$0xf]
  %v28 = vld [vmem:[%s1 + $0x20] sm:$0xf]
  %v29 = vld [vmem:[%s1 + $0x24] sm:$0xf]
  %v30 = vld [vmem:[%s1 + $0x28] sm:$0xf]
  %v31 = vld [vmem:[%s1 + $0x2c] sm:$0xf]
  %v32 = vld [vmem:[%s1 + $0x30] sm:$0xf]
  %v33 = vld [vmem:[%s1 + $0x34] sm:$0xf]
  %v34 = vld [vmem:[%s1 + $0x38] sm:$0xf]
  %v35 = vld [vmem:[%s1 + $0x3c] sm:$0xf]
  %v52 = vunpack.c.l.b16 %v20
  %v53 = vunpack.c.l.b16 %v21
  %v54 = vunpack.c.l.b16 %v22
  %v55 = vunpack.c.l.b16 %v23
  %v56 = vunpack.c.l.b16 %v24
  %v57 = vunpack.c.l.b16 %v25
  %v58 = vunpack.c.l.b16 %v26
  %v59 = vunpack.c.l.b16 %v27
  %v60 = vunpack.c.l.b16 %v28
  %v61 = vunpack.c.l.b16 %v29
  %v62 = vunpack.c.l.b16 %v30
  %v63 = vunpack.c.l.b16 %v31
  %v64 = vunpack.c.l.b16 %v32
  %v65 = vunpack.c.l.b16 %v33
  %v66 = vunpack.c.l.b16 %v34
  %v67 = vunpack.c.l.b16 %v35
  %v68 = vpack.c.b16 %v53, %v52
  %v69 = vpack.c.b16 %v55, %v54
  %v70 = vpack.c.b16 %v57, %v56
  %v71 = vpack.c.b16 %v59, %v58
  %v72 = vpack.c.b16 %v61, %v60
  %v73 = vpack.c.b16 %v63, %v62
  %v74 = vpack.c.b16 %v65, %v64
  %v75 = vpack.c.b16 %v67, %v66
  %84 = vmatprep.subr.bf16.mxu0 0
  %85 = vmatpush1.bf16.msra.mxu0 %v75
  %86 = vmatprep.subr.bf16.mxu0 0
  %87 = vmatpush1.bf16.msra.mxu0 %v74
  %88 = vmatprep.subr.bf16.mxu0 0
  %89 = vmatpush1.bf16.msra.mxu0 %v73
  %90 = vmatprep.subr.bf16.mxu0 0
  %91 = vmatpush1.bf16.msra.mxu0 %v72
  %92 = vmatprep.subr.bf16.mxu0 0
  %93 = vmatpush1.bf16.msra.mxu0 %v71
  %94 = vmatprep.subr.bf16.mxu0 0
  %95 = vmatpush1.bf16.msra.mxu0 %v70
  %96 = vmatprep.subr.bf16.mxu0 0
  %97 = vmatpush1.bf16.msra.mxu0 %v69
  %98 = vmatprep.subr.bf16.mxu0 0
  %99 = vmatpush1.bf16.msra.mxu0 %v68
  %100 = vmatprep.subr.bf16.mxu0 0
  %101 = vmatpush2.bf16.msra.mxu0 0
  %102 = vmatprep.subr.bf16.mxu0 0
  %103 = vmatpush2.bf16.msra.mxu0 0
  %104 = vmatprep.subr.bf16.mxu0 0
  %105 = vmatpush2.bf16.msra.mxu0 0
  %106 = vmatprep.subr.bf16.mxu0 0
  %107 = vmatpush2.bf16.msra.mxu0 0
  %108 = vmatprep.subr.bf16.mxu0 0
  %109 = vmatpush2.bf16.msra.mxu0 0
  %110 = vmatprep.subr.bf16.mxu0 0
  %111 = vmatpush2.bf16.msra.mxu0 0
  %112 = vmatprep.subr.bf16.mxu0 0
  %113 = vmatpush2.bf16.msra.mxu0 0
  %114 = vmatprep.subr.bf16.mxu0 0
  %115 = vmatpush2.bf16.msra.mxu0 0
  %116 = vmatprep.mubr.bf16.mxu0 0
  %117 = vmatmul.mubr.bf16.gmra.mxu0 %v19
  %v118 = vpop.f32.mrf.mxu0
  %v119 = vadd.f32 0.0, %v118
  %v120 = vpop.f32.mrf.mxu0
  %v121 = vpop.f32.mrf.mxu0
  %v122 = vpop.f32.mrf.mxu0
  %123 = vdwg.mxu0
  %v124 = vadd.f32 %v17, %v119
  %125 = vst [vmem:[#allocation2] sm:$0x3] %v124
  // Predicated region
  $region14: #{fwd.11} parent=0 // pred_check
    %p126 = pneg %p12
  $region15: #{fwd.11} parent=0 // pred_check_branch
    %128 = sbr.rel (%p126) target = $region17
  $region16: #{fwd.11} parent=0 // pred_region
    %v129 = vld [vmem:[#allocation2] sm:$0x3]
    %130 = vst [vmem:[%s2] sm:$0x3] %v129
  $region17: #{fwd.11} parent=0 // pred_fallthru
    _
  // Predicated region
  $region18: #{fwd.11} parent=0 // pred_check
    _
  $region19: #{fwd.11} parent=0 // pred_check_branch
    %132 = sbr.rel (0) target = $region21
  $region20: #{fwd.11} parent=0 // pred_region
    _
  $region21: #{fwd.11} parent=0 // pred_fallthru
    _
  // Predicated region
  $region22: #{fwd.11} parent=0 // pred_check
    _
  $region23: #{fwd.11} parent=0 // pred_check_branch
    %134 = sbr.rel (0) target = $region25
  $region24: #{fwd.11} parent=0 // pred_region
    _
  $region25: #{fwd.11} parent=0 // pred_fallthru
    _

// kernel: fwd.13
$region0: #{fwd.13}
  #allocation0 [shape = 'u32[]', space=smem, size = 0x4, offset = 0x4, fixed_abs, tag = 'smem constant byte address 0x4 - core index']
  #allocation1 [shape = 'u32[144,128]{1,0:T(1,128)}', space=vmem, size = 0x12000, scoped, tag = 'internal scratch']
  %s0 = inlined_call_operand.vmem [shape: f32[2,128], index: 0, kind: input, shape index: {}]
  %s1 = inlined_call_operand.vmem [shape: f32[1,128], index: 1, kind: input, shape index: {}]
  %s2 = inlined_call_operand.vmem [shape: bf16[128,256], index: 2, kind: input, shape index: {}]
  %s3 = inlined_call_operand.vmem [shape: f32[2,256], index: 3, kind: output, shape index: {}]
  %s4 = sld [smem:[#allocation0]]
  $region22: #{fwd.13} parent=0
    _
  %s6 = ssub.s32 1, %s4
  %s7 = scalar_select 0, %s6, %s4
  // Predicated region
  $region2: #{fwd.13} parent=0 // pred_check
    _
  $region3: #{fwd.13} parent=0 // pred_check_branch
    %9 = sbr.rel (0) target = $region5
  $region4: #{fwd.13} parent=0 // pred_region
    _
  $region5: #{fwd.13} parent=0 // pred_fallthru
    _
  // Predicated region
  $region6: #{fwd.13} parent=0 // pred_check
    _
  $region7: #{fwd.13} parent=0 // pred_check_branch
    %11 = sbr.rel (0) target = $region9
  $region8: #{fwd.13} parent=0 // pred_region
    _
  $region9: #{fwd.13} parent=0 // pred_fallthru
    _
  // Predicated region
  $region10: #{fwd.13} parent=0 // pred_check
    _
  $region11: #{fwd.13} parent=0 // pred_check_branch
    %13 = sbr.rel (0) target = $region13
  $region12: #{fwd.13} parent=0 // pred_region
    _
  $region13: #{fwd.13} parent=0 // pred_fallthru
    _
  %v15 = vld [vmem:[%s0] sm:$0x3]
  %v16 = vmul.f32 %v15, %v15
  %vm17 = vcmask 1041408
  %v18 = vsel %vm17, %v16, 0.0
  %19 = vadd.xlane.f32.xlu0 %v18
  %v20 = vpop.xlane.xlu0 %19
  %v21 = vrcp.pop 128.0
  %v22 = vmul.f32 %v20, %v21
  %v23 = vadd.f32 %v22, 1e-05
  %v24 = vrsqrt.pop %v23
  %v25 = vmul.f32 %v15, %v24
  %v26 = vld [vmem:[%s1] sm:$0x1]
  %v28 = vlaneseq
  %v29 = vshrl.u32 %v28, 7
  %v30 = vsub.s32 0, %v29
  %v31 = vrot.slane %v26, %v30
  %v33 = vmul.f32 %v25, %v31
  %v34 = vpack.c.bf16 %v33, %v33
  %v35 = vld [vmem:[%s2] sm:$0xff]
  %v36 = vld [vmem:[%s2 + $0x8] sm:$0xff]
  %v37 = vld [vmem:[%s2 + $0x10] sm:$0xff]
  %v38 = vld [vmem:[%s2 + $0x18] sm:$0xff]
  %v39 = vld [vmem:[%s2 + $0x20] sm:$0xff]
  %v40 = vld [vmem:[%s2 + $0x28] sm:$0xff]
  %v41 = vld [vmem:[%s2 + $0x30] sm:$0xff]
  %v42 = vld [vmem:[%s2 + $0x38] sm:$0xff]
  %v43 = vld [vmem:[%s2 + $0x40] sm:$0xff]
  %v44 = vld [vmem:[%s2 + $0x48] sm:$0xff]
  %v45 = vld [vmem:[%s2 + $0x50] sm:$0xff]
  %v46 = vld [vmem:[%s2 + $0x58] sm:$0xff]
  %v47 = vld [vmem:[%s2 + $0x60] sm:$0xff]
  %v48 = vld [vmem:[%s2 + $0x68] sm:$0xff]
  %v49 = vld [vmem:[%s2 + $0x70] sm:$0xff]
  %v50 = vld [vmem:[%s2 + $0x78] sm:$0xff]
  %v67 = vunpack.c.l.b16 %v35
  %v68 = vunpack.c.h.b16 %v35
  %v69 = vunpack.c.l.b16 %v36
  %v70 = vunpack.c.h.b16 %v36
  %v71 = vunpack.c.l.b16 %v37
  %v72 = vunpack.c.h.b16 %v37
  %v73 = vunpack.c.l.b16 %v38
  %v74 = vunpack.c.h.b16 %v38
  %v75 = vunpack.c.l.b16 %v39
  %v76 = vunpack.c.h.b16 %v39
  %v77 = vunpack.c.l.b16 %v40
  %v78 = vunpack.c.h.b16 %v40
  %v79 = vunpack.c.l.b16 %v41
  %v80 = vunpack.c.h.b16 %v41
  %v81 = vunpack.c.l.b16 %v42
  %v82 = vunpack.c.h.b16 %v42
  %v83 = vunpack.c.l.b16 %v43
  %v84 = vunpack.c.h.b16 %v43
  %v85 = vunpack.c.l.b16 %v44
  %v86 = vunpack.c.h.b16 %v44
  %v87 = vunpack.c.l.b16 %v45
  %v88 = vunpack.c.h.b16 %v45
  %v89 = vunpack.c.l.b16 %v46
  %v90 = vunpack.c.h.b16 %v46
  %v91 = vunpack.c.l.b16 %v47
  %v92 = vunpack.c.h.b16 %v47
  %v93 = vunpack.c.l.b16 %v48
  %v94 = vunpack.c.h.b16 %v48
  %v95 = vunpack.c.l.b16 %v49
  %v96 = vunpack.c.h.b16 %v49
  %v97 = vunpack.c.l.b16 %v50
  %v98 = vunpack.c.h.b16 %v50
  %v99 = vpack.c.b16 %v69, %v67
  %v100 = vpack.c.b16 %v70, %v68
  %v101 = vpack.c.b16 %v73, %v71
  %v102 = vpack.c.b16 %v74, %v72
  %v103 = vpack.c.b16 %v77, %v75
  %v104 = vpack.c.b16 %v78, %v76
  %v105 = vpack.c.b16 %v81, %v79
  %v106 = vpack.c.b16 %v82, %v80
  %v107 = vpack.c.b16 %v85, %v83
  %v108 = vpack.c.b16 %v86, %v84
  %v109 = vpack.c.b16 %v89, %v87
  %v110 = vpack.c.b16 %v90, %v88
  %v111 = vpack.c.b16 %v93, %v91
  %v112 = vpack.c.b16 %v94, %v92
  %v113 = vpack.c.b16 %v97, %v95
  %v114 = vpack.c.b16 %v98, %v96
  %131 = vmatprep.subr.bf16.mxu0 %v114
  %132 = vmatpush1.bf16.msra.mxu0 %v113
  %133 = vmatprep.subr.bf16.mxu0 %v112
  %134 = vmatpush1.bf16.msra.mxu0 %v111
  %135 = vmatprep.subr.bf16.mxu0 %v110
  %136 = vmatpush1.bf16.msra.mxu0 %v109
  %137 = vmatprep.subr.bf16.mxu0 %v108
  %138 = vmatpush1.bf16.msra.mxu0 %v107
  %139 = vmatprep.subr.bf16.mxu0 %v106
  %140 = vmatpush1.bf16.msra.mxu0 %v105
  %141 = vmatprep.subr.bf16.mxu0 %v104
  %142 = vmatpush1.bf16.msra.mxu0 %v103
  %143 = vmatprep.subr.bf16.mxu0 %v102
  %144 = vmatpush1.bf16.msra.mxu0 %v101
  %145 = vmatprep.subr.bf16.mxu0 %v100
  %146 = vmatpush1.bf16.msra.mxu0 %v99
  %147 = vmatprep.subr.bf16.mxu0 0
  %148 = vmatpush2.bf16.msra.mxu0 0
  %149 = vmatprep.subr.bf16.mxu0 0
  %150 = vmatpush2.bf16.msra.mxu0 0
  %151 = vmatprep.subr.bf16.mxu0 0
  %152 = vmatpush2.bf16.msra.mxu0 0
  %153 = vmatprep.subr.bf16.mxu0 0
  %154 = vmatpush2.bf16.msra.mxu0 0
  %155 = vmatprep.subr.bf16.mxu0 0
  %156 = vmatpush2.bf16.msra.mxu0 0
  %157 = vmatprep.subr.bf16.mxu0 0
  %158 = vmatpush2.bf16.msra.mxu0 0
  %159 = vmatprep.subr.bf16.mxu0 0
  %160 = vmatpush2.bf16.msra.mxu0 0
  %161 = vmatprep.subr.bf16.mxu0 0
  %162 = vmatpush2.bf16.msra.mxu0 0
  %163 = vmatprep.mubr.bf16.mxu0 0
  %164 = vmatmul.mubr.bf16.gmra.mxu0 %v34
  %v165 = vpop.f32.mrf.mxu0
  %v166 = vadd.f32 0.0, %v165
  %v167 = vpop.f32.mrf.mxu0
  %v168 = vadd.f32 0.0, %v167
  %v169 = vpop.f32.mrf.mxu0
  %v170 = vpop.f32.mrf.mxu0
  %171 = vdwg.mxu0
  %v174 = vcombine.low %v166, %v168
  %v176 = vunpack.c.l.s4 1983009808
  %v177 = vunpack.c.0.s8 %v176
  %v178 = vlaneseq
  %v179 = vshrl.u32 %v178, 7
  %v180 = vsub.s32 %v177, %v179
  %v181 = vrot.slane %v174, %v180
  %183 = vst [vmem:[%s3] sm:$0xf] %v181
  // Predicated region
  $region14: #{fwd.13} parent=0 // pred_check
    _
  $region15: #{fwd.13} parent=0 // pred_check_branch
    %185 = sbr.rel (0) target = $region17
  $region16: #{fwd.13} parent=0 // pred_region
    _
  $region17: #{fwd.13} parent=0 // pred_fallthru
    _
  // Predicated region
  $region18: #{fwd.13} parent=0 // pred_check
    _
  $region19: #{fwd.13} parent=0 // pred_check_branch
    %187 = sbr.rel (0) target = $region21
  $region20: #{fwd.13} parent=0 // pred_region
    _
  $region21: #{fwd.13} parent=0 // pred_fallthru
    _

// kernel: fwd.12
$region0: #{fwd.12}
  #allocation0 [shape = 'u32[]', space=smem, size = 0x4, offset = 0x4, fixed_abs, tag = 'smem constant byte address 0x4 - core index']
  #allocation1 [shape = 'u32[144,128]{1,0:T(1,128)}', space=vmem, size = 0x12000, scoped, tag = 'internal scratch']
  #allocation2 [shape = 'bf16[2,128]{1,0:T(2,128)(2,1)}', space=vmem, size = 0x200, scoped, tag = 'scratch operand']
  %s0 = inlined_call_operand.vmem [shape: f32[2,128], index: 0, kind: input, shape index: {}]
  %s1 = inlined_call_operand.vmem [shape: f32[1,128], index: 1, kind: input, shape index: {}]
  %s2 = inlined_call_operand.vmem [shape: bf16[128,384], index: 2, kind: input, shape index: {}]
  %s3 = inlined_call_operand.vmem [shape: bf16[128,384], index: 3, kind: input, shape index: {}]
  %s4 = inlined_call_operand.vmem [shape: bf16[384,128], index: 4, kind: input, shape index: {}]
  %s5 = inlined_call_operand.vmem [shape: f32[2,128], index: 5, kind: output, shape index: {}]
  %s6 = sld [smem:[#allocation0]]
  $region139: #{fwd.12} parent=0
    _
  %s8 = ssub.s32 1, %s6
  %s9 = scalar_select 0, %s8, %s6
  $region1: #{fwd.12} parent=0
    #allocation3 [shape = 'u8[65536]{0}', space=vmem, size = 0x10000, scoped, tag = 'input window, operand 2']
    #allocation4 [shape = 'u8[65536]{0}', space=vmem, size = 0x10000, scoped, tag = 'input window, operand 3']
    loop: start=0, step=1, limit=5
    $region2: #{fwd.12} parent=1 // loop_pre_header
      _
    $region3: #{fwd.12} parent=1 // loop_header
      %s11 = sphi 0, %s15
      %p12 = scmp.ge.s32.totalorder %s11, 5
      %s19 = sphi 0, %s19
      %s21 = sphi 0, %s19
      %s22 = sphi 0, %s21
      %s36 = sphi 0, %s22
      %s40 = sphi 0, %s40
      %s42 = sphi 0, %s40
      %s43 = sphi 0, %s42
      %s57 = sphi 0, %s43
      %s63 = sphi 0, %s65
      %s66 = sphi 0, %s63
      %s67 = sphi 0, %s66
      %s83 = sphi 0, %s67
      %s89 = sphi 0, %s91
      %s92 = sphi 0, %s89
      %s93 = sphi 0, %s92
      %s109 = sphi 0, %s93
      %s115 = sphi 0, %s117
      %s118 = sphi 0, %s115
      %s119 = sphi 0, %s118
      %s135 = sphi 0, %s119
      %s139 = sphi 0, %s139
      %s141 = sphi 0, %s139
      %s142 = sphi 0, %s141
      %s156 = sphi 0, %s142
    $region4: #{fwd.12} parent=1 // loop_header_branch
      %14 = sbr.rel (%p12) target = $region8
    $region5: #{fwd.12} parent=1 // loop_body
      %s16 = ssub.s32 %s11, 1
      %s17 = ssub.s32 %s11, 2
      %s18 = sadd.s32 %s11, 1
      %s20 = sadd.s32 %s19, 1
      %p23 = scmp.eq.s32.totalorder %s11, 2
      %p24 = scmp.ne.s32.totalorder %s19, %s21
      %p25 = scmp.eq.s32.totalorder %s11, 0
      %p26 = por %p24, %p25
      %p27 = scmp.ne.s32.totalorder %s19, %s21
      %p28 = scmp.eq.s32.totalorder %s16, 2
      %p29 = por %p27, %p28
      %p30 = scmp.ne.s32.totalorder %s21, %s22
      %p31 = scmp.eq.s32.totalorder %s16, 0
      %p32 = por %p30, %p31
      %p33 = scmp.ne.s32.totalorder %s21, %s22
      %p34 = scmp.eq.s32.totalorder %s17, 2
      %p35 = por %p33, %p34
      %p37 = scmp.ne.s32.totalorder %s22, %s36
      %p38 = scmp.eq.s32.totalorder %s17, 0
      %p39 = por %p37, %p38
      %s41 = sadd.s32 %s40, 1
      %p44 = scmp.eq.s32.totalorder %s11, 2
      %p45 = scmp.ne.s32.totalorder %s40, %s42
      %p46 = scmp.eq.s32.totalorder %s11, 0
      %p47 = por %p45, %p46
      %p48 = scmp.ne.s32.totalorder %s40, %s42
      %p49 = scmp.eq.s32.totalorder %s16, 2
      %p50 = por %p48, %p49
      %p51 = scmp.ne.s32.totalorder %s42, %s43
      %p52 = scmp.eq.s32.totalorder %s16, 0
      %p53 = por %p51, %p52
      %p54 = scmp.ne.s32.totalorder %s42, %s43
      %p55 = scmp.eq.s32.totalorder %s17, 2
      %p56 = por %p54, %p55
      %p58 = scmp.ne.s32.totalorder %s43, %s57
      %p59 = scmp.eq.s32.totalorder %s17, 0
      %p60 = por %p58, %p59
      %s61 = ssub.s32 %s11, %s18
      %p62 = scmp.eq.s32.totalorder %s61, 0
      %s64 = sadd.s32 %s63, 1
      %s65 = scalar_select %p62, %s63, %s64
      %p68 = pneg %p62
      %p69 = scmp.eq.s32.totalorder %s11, 2
      %p70 = por %p68, %p69
      %p71 = scmp.ne.s32.totalorder %s63, %s66
      %p72 = scmp.eq.s32.totalorder %s11, 0
      %p73 = por %p71, %p72
      %p74 = scmp.ne.s32.totalorder %s63, %s66
      %p75 = scmp.eq.s32.totalorder %s16, 2
      %p76 = por %p74, %p75
      %p77 = scmp.ne.s32.totalorder %s66, %s67
      %p78 = scmp.eq.s32.totalorder %s16, 0
      %p79 = por %p77, %p78
      %p80 = scmp.ne.s32.totalorder %s66, %s67
      %p81 = scmp.eq.s32.totalorder %s17, 2
      %p82 = por %p80, %p81
      %p84 = scmp.ne.s32.totalorder %s67, %s83
      %p85 = scmp.eq.s32.totalorder %s17, 0
      %p86 = por %p84, %p85
      %s87 = ssub.s32 %s11, %s18
      %p88 = scmp.eq.s32.totalorder %s87, 0
      %s90 = sadd.s32 %s89, 1
      %s91 = scalar_select %p88, %s89, %s90
      %p94 = pneg %p88
      %p95 = scmp.eq.s32.totalorder %s11, 2
      %p96 = por %p94, %p95
      %p97 = scmp.ne.s32.totalorder %s89, %s92
      %p98 = scmp.eq.s32.totalorder %s11, 0
      %p99 = por %p97, %p98
      %p100 = scmp.ne.s32.totalorder %s89, %s92
      %p101 = scmp.eq.s32.totalorder %s16, 2
      %p102 = por %p100, %p101
      %p103 = scmp.ne.s32.totalorder %s92, %s93
      %p104 = scmp.eq.s32.totalorder %s16, 0
      %p105 = por %p103, %p104
      %p106 = scmp.ne.s32.totalorder %s92, %s93
      %p107 = scmp.eq.s32.totalorder %s17, 2
      %p108 = por %p106, %p107
      %p110 = scmp.ne.s32.totalorder %s93, %s109
      %p111 = scmp.eq.s32.totalorder %s17, 0
      %p112 = por %p110, %p111
      %s113 = ssub.s32 %s11, %s18
      %p114 = scmp.eq.s32.totalorder %s113, 0
      %s116 = sadd.s32 %s115, 1
      %s117 = scalar_select %p114, %s115, %s116
      %p120 = pneg %p114
      %p121 = scmp.eq.s32.totalorder %s11, 2
      %p122 = por %p120, %p121
      %p123 = scmp.ne.s32.totalorder %s115, %s118
      %p124 = scmp.eq.s32.totalorder %s11, 0
      %p125 = por %p123, %p124
      %p126 = scmp.ne.s32.totalorder %s115, %s118
      %p127 = scmp.eq.s32.totalorder %s16, 2
      %p128 = por %p126, %p127
      %p129 = scmp.ne.s32.totalorder %s118, %s119
      %p130 = scmp.eq.s32.totalorder %s16, 0
      %p131 = por %p129, %p130
      %p132 = scmp.ne.s32.totalorder %s118, %s119
      %p133 = scmp.eq.s32.totalorder %s17, 2
      %p134 = por %p132, %p133
      %p136 = scmp.ne.s32.totalorder %s119, %s135
      %p137 = scmp.eq.s32.totalorder %s17, 0
      %p138 = por %p136, %p137
      %s140 = sadd.s32 %s139, 1
      %p143 = scmp.eq.s32.totalorder %s11, 2
      %p144 = scmp.ne.s32.totalorder %s139, %s141
      %p145 = scmp.eq.s32.totalorder %s11, 0
      %p146 = por %p144, %p145
      %p147 = scmp.ne.s32.totalorder %s139, %s141
      %p148 = scmp.eq.s32.totalorder %s16, 2
      %p149 = por %p147, %p148
      %p150 = scmp.ne.s32.totalorder %s141, %s142
      %p151 = scmp.eq.s32.totalorder %s16, 0
      %p152 = por %p150, %p151
      %p153 = scmp.ne.s32.totalorder %s141, %s142
      %p154 = scmp.eq.s32.totalorder %s17, 2
      %p155 = por %p153, %p154
      %p157 = scmp.ne.s32.totalorder %s142, %s156
      %p158 = scmp.eq.s32.totalorder %s17, 0
      %p159 = por %p157, %p158
      %p160 = scmp.le.s32.totalorder 1, %s11
      %p161 = scmp.lt.s32.totalorder %s11, 4
      %p162 = pnand %p160, %p161
      %p163 = pneg %p162
      // Predicated region
      $region9: #{fwd.12} parent=5 // pred_check
        _
      $region10: #{fwd.12} parent=5 // pred_check_branch
        %165 = sbr.rel (%p162) target = $region12
      $region11: #{fwd.12} parent=5 // pred_region
        %s166 = ssub.s32 %s11, 1
        // Predicated region
        $region13: #{fwd.12} parent=11 // pred_check
          %p167 = pneg %p32
        $region14: #{fwd.12} parent=11 // pred_check_branch
          %169 = sbr.rel (%p167) target = $region16
        $region15: #{fwd.12} parent=11 // pred_region
          _
        $region16: #{fwd.12} parent=11 // pred_fallthru
          _
        // Predicated region
        $region17: #{fwd.12} parent=11 // pred_check
          %p170 = pneg %p53
        $region18: #{fwd.12} parent=11 // pred_check_branch
          %172 = sbr.rel (%p170) target = $region20
        $region19: #{fwd.12} parent=11 // pred_region
          _
        $region20: #{fwd.12} parent=11 // pred_fallthru
          _
      $region12: #{fwd.12} parent=5 // pred_fallthru
        _
      %p173 = scmp.lt.s32.totalorder %s11, 3
      // Predicated region
      $region21: #{fwd.12} parent=5 // pred_check
        %p174 = pneg %p173
      $region22: #{fwd.12} parent=5 // pred_check_branch
        %176 = sbr.rel (%p174) target = $region24
      $region23: #{fwd.12} parent=5 // pred_region
        // Predicated region
        $region25: #{fwd.12} parent=23 // pred_check
          %p177 = pneg %p73
        $region26: #{fwd.12} parent=23 // pred_check_branch
          %179 = sbr.rel (%p177) target = $region28
        $region27: #{fwd.12} parent=23 // pred_region
          %s180 = sand.u32 %s63, 1
          %s181 = sand.u32 %s63, 1
          %s182 = smul.addr %s181, 64
          %s183 = scalar_lea.vmem [#allocation3], %s182
          %s184 = smul.addr %s11, 4
          %s185 = scalar_lea.vmem %s2, %s184
          // Predicated region
          $region29: #{fwd.12} parent=27 // pred_check
            _
          $region30: #{fwd.12} parent=27 // pred_check_branch
            %187 = sbr.rel (0) target = $region32
          $region31: #{fwd.12} parent=27 // pred_region
            // Predicated region
            $region33: #{fwd.12} parent=31 // pred_check
              _
            $region34: #{fwd.12} parent=31 // pred_check_branch
              %189 = sbr.rel target = $region36
            $region35: #{fwd.12} parent=31 // pred_region
              // Predicated region
              $region48: #{fwd.12} parent=35 // pred_check
                _
              $region49: #{fwd.12} parent=35 // pred_check_branch
                %235 = sbr.rel (0) target = $region51
              $region50: #{fwd.12} parent=35 // pred_region
                loop: start=0, step=1, limit=1
                $region52: #{fwd.12} parent=50 // loop_pre_header
                  _
                $region53: #{fwd.12} parent=50 // loop_header
                  %s237 = sphi 0, %s241
                  %p238 = scmp.ge.s32.totalorder %s237, 1
                  %s242 = sphi %s185, %s185
                  %s243 = sphi %s183, %s183
                $region54: #{fwd.12} parent=50 // loop_header_branch
                  %240 = sbr.rel (%p238) target = $region58
                $region55: #{fwd.12} parent=50 // loop_body
                  _
                $region56: #{fwd.12} parent=50 // loop_footer
                  %s241 = sadd.s32 1, %s237
                $region57: #{fwd.12} parent=50 // loop_footer_branch
                  %236 = sbr.rel target = $region53
                $region58: #{fwd.12} parent=50 // loop_exit
                  _
                %s245 = ssub.s32 16, 1
                loop: start=0, step=1, limit=1
                $region59: #{fwd.12} parent=50 // loop_pre_header
                  _
                $region60: #{fwd.12} parent=50 // loop_header
                  %s247 = sphi 0, %s251
                  %p248 = scmp.ge.s32.totalorder %s247, 1
                  %s252 = sphi %s185, %s185
                  %s253 = sphi %s183, %s183
                $region61: #{fwd.12} parent=50 // loop_header_branch
                  %250 = sbr.rel (%p248) target = $region65
                $region62: #{fwd.12} parent=50 // loop_body
                  %v254 = vld [vmem:[%s252] sm:%s245]
                  %255 = vst [vmem:[%s253] sm:%s245] %v254
                  %v256 = vld [vmem:[%s252 + $0xc] sm:%s245]
                  %257 = vst [vmem:[%s253 + $0x4] sm:%s245] %v256
                  %v258 = vld [vmem:[%s252 + $0x18] sm:%s245]
                  %259 = vst [vmem:[%s253 + $0x8] sm:%s245] %v258
                  %v260 = vld [vmem:[%s252 + $0x24] sm:%s245]
                  %261 = vst [vmem:[%s253 + $0xc] sm:%s245] %v260
                  %v262 = vld [vmem:[%s252 + $0x30] sm:%s245]
                  %263 = vst [vmem:[%s253 + $0x10] sm:%s245] %v262
                  %v264 = vld [vmem:[%s252 + $0x3c] sm:%s245]
                  %265 = vst [vmem:[%s253 + $0x14] sm:%s245] %v264
                  %v266 = vld [vmem:[%s252 + $0x48] sm:%s245]
                  %267 = vst [vmem:[%s253 + $0x18] sm:%s245] %v266
                  %v268 = vld [vmem:[%s252 + $0x54] sm:%s245]
                  %269 = vst [vmem:[%s253 + $0x1c] sm:%s245] %v268
                  %v270 = vld [vmem:[%s252 + $0x60] sm:%s245]
                  %271 = vst [vmem:[%s253 + $0x20] sm:%s245] %v270
                  %v272 = vld [vmem:[%s252 + $0x6c] sm:%s245]
                  %273 = vst [vmem:[%s253 + $0x24] sm:%s245] %v272
                  %v274 = vld [vmem:[%s252 + $0x78] sm:%s245]
                  %275 = vst [vmem:[%s253 + $0x28] sm:%s245] %v274
                  %v276 = vld [vmem:[%s252 + $0x84] sm:%s245]
                  %277 = vst [vmem:[%s253 + $0x2c] sm:%s245] %v276
                  %v278 = vld [vmem:[%s252 + $0x90] sm:%s245]
                  %279 = vst [vmem:[%s253 + $0x30] sm:%s245] %v278
                  %v280 = vld [vmem:[%s252 + $0x9c] sm:%s245]
                  %281 = vst [vmem:[%s253 + $0x34] sm:%s245] %v280
                  %v282 = vld [vmem:[%s252 + $0xa8] sm:%s245]
                  %283 = vst [vmem:[%s253 + $0x38] sm:%s245] %v282
                  %v284 = vld [vmem:[%s252 + $0xb4] sm:%s245]
                  %285 = vst [vmem:[%s253 + $0x3c] sm:%s245] %v284
                $region63: #{fwd.12} parent=50 // loop_footer
                  %s251 = sadd.s32 1, %s247
                $region64: #{fwd.12} parent=50 // loop_footer_branch
                  %246 = sbr.rel target = $region60
                $region65: #{fwd.12} parent=50 // loop_exit
                  _
              $region51: #{fwd.12} parent=35 // pred_fallthru
                _
            $region36: #{fwd.12} parent=31 // pred_fallthru
              _
            // Predicated region
            $region37: #{fwd.12} parent=31 // pred_check
              _
            $region38: #{fwd.12} parent=31 // pred_check_branch
              %191 = sbr.rel (0) target = $region40
            $region39: #{fwd.12} parent=31 // pred_region
              %s193 = ssub.s32 16, 1
              loop: start=0, step=1, limit=1
              $region41: #{fwd.12} parent=39 // loop_pre_header
                _
              $region42: #{fwd.12} parent=39 // loop_header
                %s195 = sphi 0, %s199
                %p196 = scmp.ge.s32.totalorder %s195, 1
                %s200 = sphi %s185, %s185
                %s201 = sphi %s183, %s183
              $region43: #{fwd.12} parent=39 // loop_header_branch
                %198 = sbr.rel (%p196) target = $region47
              $region44: #{fwd.12} parent=39 // loop_body
                %v202 = vld [vmem:[%s200] sm:%s193]
                %203 = vst [vmem:[%s201] sm:%s193] %v202
                %v204 = vld [vmem:[%s200 + $0xc] sm:%s193]
                %205 = vst [vmem:[%s201 + $0x4] sm:%s193] %v204
                %v206 = vld [vmem:[%s200 + $0x18] sm:%s193]
                %207 = vst [vmem:[%s201 + $0x8] sm:%s193] %v206
                %v208 = vld [vmem:[%s200 + $0x24] sm:%s193]
                %209 = vst [vmem:[%s201 + $0xc] sm:%s193] %v208
                %v210 = vld [vmem:[%s200 + $0x30] sm:%s193]
                %211 = vst [vmem:[%s201 + $0x10] sm:%s193] %v210
                %v212 = vld [vmem:[%s200 + $0x3c] sm:%s193]
                %213 = vst [vmem:[%s201 + $0x14] sm:%s193] %v212
                %v214 = vld [vmem:[%s200 + $0x48] sm:%s193]
                %215 = vst [vmem:[%s201 + $0x18] sm:%s193] %v214
                %v216 = vld [vmem:[%s200 + $0x54] sm:%s193]
                %217 = vst [vmem:[%s201 + $0x1c] sm:%s193] %v216
                %v218 = vld [vmem:[%s200 + $0x60] sm:%s193]
                %219 = vst [vmem:[%s201 + $0x20] sm:%s193] %v218
                %v220 = vld [vmem:[%s200 + $0x6c] sm:%s193]
                %221 = vst [vmem:[%s201 + $0x24] sm:%s193] %v220
                %v222 = vld [vmem:[%s200 + $0x78] sm:%s193]
                %223 = vst [vmem:[%s201 + $0x28] sm:%s193] %v222
                %v224 = vld [vmem:[%s200 + $0x84] sm:%s193]
                %225 = vst [vmem:[%s201 + $0x2c] sm:%s193] %v224
                %v226 = vld [vmem:[%s200 + $0x90] sm:%s193]
                %227 = vst [vmem:[%s201 + $0x30] sm:%s193] %v226
                %v228 = vld [vmem:[%s200 + $0x9c] sm:%s193]
                %229 = vst [vmem:[%s201 + $0x34] sm:%s193] %v228
                %v230 = vld [vmem:[%s200 + $0xa8] sm:%s193]
                %231 = vst [vmem:[%s201 + $0x38] sm:%s193] %v230
                %v232 = vld [vmem:[%s200 + $0xb4] sm:%s193]
                %233 = vst [vmem:[%s201 + $0x3c] sm:%s193] %v232
              $region45: #{fwd.12} parent=39 // loop_footer
                %s199 = sadd.s32 1, %s195
              $region46: #{fwd.12} parent=39 // loop_footer_branch
                %194 = sbr.rel target = $region42
              $region47: #{fwd.12} parent=39 // loop_exit
                _
            $region40: #{fwd.12} parent=31 // pred_fallthru
              _
          $region32: #{fwd.12} parent=27 // pred_fallthru
            _
          %286 = vnop
        $region28: #{fwd.12} parent=23 // pred_fallthru
          _
        // Predicated region
        $region66: #{fwd.12} parent=23 // pred_check
          %p287 = pneg %p99
        $region67: #{fwd.12} parent=23 // pred_check_branch
          %289 = sbr.rel (%p287) target = $region69
        $region68: #{fwd.12} parent=23 // pred_region
          %s290 = sand.u32 %s89, 1
          %s291 = sand.u32 %s89, 1
          %s292 = smul.addr %s291, 64
          %s293 = scalar_lea.vmem [#allocation4], %s292
          %s294 = smul.addr %s11, 4
          %s295 = scalar_lea.vmem %s3, %s294
          // Predicated region
          $region70: #{fwd.12} parent=68 // pred_check
            _
          $region71: #{fwd.12} parent=68 // pred_check_branch
            %297 = sbr.rel (0) target = $region73
          $region72: #{fwd.12} parent=68 // pred_region
            // Predicated region
            $region74: #{fwd.12} parent=72 // pred_check
              _
            $region75: #{fwd.12} parent=72 // pred_check_branch
              %299 = sbr.rel target = $region77
            $region76: #{fwd.12} parent=72 // pred_region
              // Predicated region
              $region89: #{fwd.12} parent=76 // pred_check
                _
              $region90: #{fwd.12} parent=76 // pred_check_branch
                %345 = sbr.rel (0) target = $region92
              $region91: #{fwd.12} parent=76 // pred_region
                loop: start=0, step=1, limit=1
                $region93: #{fwd.12} parent=91 // loop_pre_header
                  _
                $region94: #{fwd.12} parent=91 // loop_header
                  %s347 = sphi 0, %s351
                  %p348 = scmp.ge.s32.totalorder %s347, 1
                  %s352 = sphi %s295, %s295
                  %s353 = sphi %s293, %s293
                $region95: #{fwd.12} parent=91 // loop_header_branch
                  %350 = sbr.rel (%p348) target = $region99
                $region96: #{fwd.12} parent=91 // loop_body
                  _
                $region97: #{fwd.12} parent=91 // loop_footer
                  %s351 = sadd.s32 1, %s347
                $region98: #{fwd.12} parent=91 // loop_footer_branch
                  %346 = sbr.rel target = $region94
                $region99: #{fwd.12} parent=91 // loop_exit
                  _
                %s355 = ssub.s32 16, 1
                loop: start=0, step=1, limit=1
                $region100: #{fwd.12} parent=91 // loop_pre_header
                  _
                $region101: #{fwd.12} parent=91 // loop_header
                  %s357 = sphi 0, %s361
                  %p358 = scmp.ge.s32.totalorder %s357, 1
                  %s362 = sphi %s295, %s295
                  %s363 = sphi %s293, %s293
                $region102: #{fwd.12} parent=91 // loop_header_branch
                  %360 = sbr.rel (%p358) target = $region106
                $region103: #{fwd.12} parent=91 // loop_body
                  %v364 = vld [vmem:[%s362] sm:%s355]
                  %365 = vst [vmem:[%s363] sm:%s355] %v364
                  %v366 = vld [vmem:[%s362 + $0xc] sm:%s355]
                  %367 = vst [vmem:[%s363 + $0x4] sm:%s355] %v366
                  %v368 = vld [vmem:[%s362 + $0x18] sm:%s355]
                  %369 = vst [vmem:[%s363 + $0x8] sm:%s355] %v368
                  %v370 = vld [vmem:[%s362 + $0x24] sm:%s355]
                  %371 = vst [vmem:[%s363 + $0xc] sm:%s355] %v370
                  %v372 = vld [vmem:[%s362 + $0x30] sm:%s355]
                  %373 = vst [vmem:[%s363 + $0x10] sm:%s355] %v372
                  %v374 = vld [vmem:[%s362 + $0x3c] sm:%s355]
                  %375 = vst [vmem:[%s363 + $0x14] sm:%s355] %v374
                  %v376 = vld [vmem:[%s362 + $0x48] sm:%s355]
                  %377 = vst [vmem:[%s363 + $0x18] sm:%s355] %v376
                  %v378 = vld [vmem:[%s362 + $0x54] sm:%s355]
                  %379 = vst [vmem:[%s363 + $0x1c] sm:%s355] %v378
                  %v380 = vld [vmem:[%s362 + $0x60] sm:%s355]
                  %381 = vst [vmem:[%s363 + $0x20] sm:%s355] %v380
                  %v382 = vld [vmem:[%s362 + $0x6c] sm:%s355]
                  %383 = vst [vmem:[%s363 + $0x24] sm:%s355] %v382
                  %v384 = vld [vmem:[%s362 + $0x78] sm:%s355]
                  %385 = vst [vmem:[%s363 + $0x28] sm:%s355] %v384
                  %v386 = vld [vmem:[%s362 + $0x84] sm:%s355]
                  %387 = vst [vmem:[%s363 + $0x2c] sm:%s355] %v386
                  %v388 = vld [vmem:[%s362 + $0x90] sm:%s355]
                  %389 = vst [vmem:[%s363 + $0x30] sm:%s355] %v388
                  %v390 = vld [vmem:[%s362 + $0x9c] sm:%s355]
                  %391 = vst [vmem:[%s363 + $0x34] sm:%s355] %v390
                  %v392 = vld [vmem:[%s362 + $0xa8] sm:%s355]
                  %393 = vst [vmem:[%s363 + $0x38] sm:%s355] %v392
                  %v394 = vld [vmem:[%s362 + $0xb4] sm:%s355]
                  %395 = vst [vmem:[%s363 + $0x3c] sm:%s355] %v394
                $region104: #{fwd.12} parent=91 // loop_footer
                  %s361 = sadd.s32 1, %s357
                $region105: #{fwd.12} parent=91 // loop_footer_branch
                  %356 = sbr.rel target = $region101
                $region106: #{fwd.12} parent=91 // loop_exit
                  _
              $region92: #{fwd.12} parent=76 // pred_fallthru
                _
            $region77: #{fwd.12} parent=72 // pred_fallthru
              _
            // Predicated region
            $region78: #{fwd.12} parent=72 // pred_check
              _
            $region79: #{fwd.12} parent=72 // pred_check_branch
              %301 = sbr.rel (0) target = $region81
            $region80: #{fwd.12} parent=72 // pred_region
              %s303 = ssub.s32 16, 1
              loop: start=0, step=1, limit=1
              $region82: #{fwd.12} parent=80 // loop_pre_header
                _
              $region83: #{fwd.12} parent=80 // loop_header
                %s305 = sphi 0, %s309
                %p306 = scmp.ge.s32.totalorder %s305, 1
                %s310 = sphi %s295, %s295
                %s311 = sphi %s293, %s293
              $region84: #{fwd.12} parent=80 // loop_header_branch
                %308 = sbr.rel (%p306) target = $region88
              $region85: #{fwd.12} parent=80 // loop_body
                %v312 = vld [vmem:[%s310] sm:%s303]
                %313 = vst [vmem:[%s311] sm:%s303] %v312
                %v314 = vld [vmem:[%s310 + $0xc] sm:%s303]
                %315 = vst [vmem:[%s311 + $0x4] sm:%s303] %v314
                %v316 = vld [vmem:[%s310 + $0x18] sm:%s303]
                %317 = vst [vmem:[%s311 + $0x8] sm:%s303] %v316
                %v318 = vld [vmem:[%s310 + $0x24] sm:%s303]
                %319 = vst [vmem:[%s311 + $0xc] sm:%s303] %v318
                %v320 = vld [vmem:[%s310 + $0x30] sm:%s303]
                %321 = vst [vmem:[%s311 + $0x10] sm:%s303] %v320
                %v322 = vld [vmem:[%s310 + $0x3c] sm:%s303]
                %323 = vst [vmem:[%s311 + $0x14] sm:%s303] %v322
                %v324 = vld [vmem:[%s310 + $0x48] sm:%s303]
                %325 = vst [vmem:[%s311 + $0x18] sm:%s303] %v324
                %v326 = vld [vmem:[%s310 + $0x54] sm:%s303]
                %327 = vst [vmem:[%s311 + $0x1c] sm:%s303] %v326
                %v328 = vld [vmem:[%s310 + $0x60] sm:%s303]
                %329 = vst [vmem:[%s311 + $0x20] sm:%s303] %v328
                %v330 = vld [vmem:[%s310 + $0x6c] sm:%s303]
                %331 = vst [vmem:[%s311 + $0x24] sm:%s303] %v330
                %v332 = vld [vmem:[%s310 + $0x78] sm:%s303]
                %333 = vst [vmem:[%s311 + $0x28] sm:%s303] %v332
                %v334 = vld [vmem:[%s310 + $0x84] sm:%s303]
                %335 = vst [vmem:[%s311 + $0x2c] sm:%s303] %v334
                %v336 = vld [vmem:[%s310 + $0x90] sm:%s303]
                %337 = vst [vmem:[%s311 + $0x30] sm:%s303] %v336
                %v338 = vld [vmem:[%s310 + $0x9c] sm:%s303]
                %339 = vst [vmem:[%s311 + $0x34] sm:%s303] %v338
                %v340 = vld [vmem:[%s310 + $0xa8] sm:%s303]
                %341 = vst [vmem:[%s311 + $0x38] sm:%s303] %v340
                %v342 = vld [vmem:[%s310 + $0xb4] sm:%s303]
                %343 = vst [vmem:[%s311 + $0x3c] sm:%s303] %v342
              $region86: #{fwd.12} parent=80 // loop_footer
                %s309 = sadd.s32 1, %s305
              $region87: #{fwd.12} parent=80 // loop_footer_branch
                %304 = sbr.rel target = $region83
              $region88: #{fwd.12} parent=80 // loop_exit
                _
            $region81: #{fwd.12} parent=72 // pred_fallthru
              _
          $region73: #{fwd.12} parent=68 // pred_fallthru
            _
          %396 = vnop
        $region69: #{fwd.12} parent=23 // pred_fallthru
          _
        // Predicated region
        $region107: #{fwd.12} parent=23 // pred_check
          %p397 = pneg %p125
        $region108: #{fwd.12} parent=23 // pred_check_branch
          %399 = sbr.rel (%p397) target = $region110
        $region109: #{fwd.12} parent=23 // pred_region
          %s400 = smul.u32 16, %s11
          %p401 = scmp.lt.s32.totalorder %s400, 47
          %s402 = scalar_select %p401, %s400, 47
          %s403 = smul.addr %s402, 4
          %s404 = scalar_lea.vmem %s4, %s403
          %s405 = smul.u32 16, %s11
        $region110: #{fwd.12} parent=23 // pred_fallthru
          _
      $region24: #{fwd.12} parent=5 // pred_fallthru
        _
      %p406 = scmp.le.s32.totalorder 1, %s11
      %p407 = scmp.lt.s32.totalorder %s11, 4
      %p408 = pnand %p406, %p407
      %p409 = pneg %p408
      // Predicated region
      $region111: #{fwd.12} parent=5 // pred_check
        _
      $region112: #{fwd.12} parent=5 // pred_check_branch
        %411 = sbr.rel (%p408) target = $region114
      $region113: #{fwd.12} parent=5 // pred_region
        %s412 = ssub.s32 %s11, 1
        %s413 = sand.u32 %s66, 1
        %s414 = sand.u32 %s66, 1
        %s415 = smul.addr %s414, 64
        %s416 = scalar_lea.vmem [#allocation3], %s415
        // Predicated region
        $region115: #{fwd.12} parent=113 // pred_check
          %p417 = pneg %p79
        $region116: #{fwd.12} parent=113 // pred_check_branch
          %419 = sbr.rel (%p417) target = $region118
        $region117: #{fwd.12} parent=113 // pred_region
          _
        $region118: #{fwd.12} parent=113 // pred_fallthru
          _
        %s420 = sand.u32 %s92, 1
        %s421 = sand.u32 %s92, 1
        %s422 = smul.addr %s421, 64
        %s423 = scalar_lea.vmem [#allocation4], %s422
        // Predicated region
        $region119: #{fwd.12} parent=113 // pred_check
          %p424 = pneg %p105
        $region120: #{fwd.12} parent=113 // pred_check_branch
          %426 = sbr.rel (%p424) target = $region122
        $region121: #{fwd.12} parent=113 // pred_region
          _
        $region122: #{fwd.12} parent=113 // pred_fallthru
          _
        %p427 = pneg %p32
        %p428 = pneg %p29
        %p429 = pneg %p53
        %p430 = pneg %p50
        %s431 = sand.u32 %s66, 1
        %s432 = sand.u32 %s66, 1
        %s433 = smul.addr %s432, 64
        %s434 = scalar_lea.vmem [#allocation3], %s433
        %p435 = pneg %p79
        %p436 = pneg %p76
        %s437 = sand.u32 %s92, 1
        %s438 = sand.u32 %s92, 1
        %s439 = smul.addr %s438, 64
        %s440 = scalar_lea.vmem [#allocation4], %s439
        %p441 = pneg %p105
        %p442 = pneg %p102
        %s443 = smul.u32 16, %s16
        %p444 = scmp.lt.s32.totalorder %s443, 47
        %s445 = scalar_select %p444, %s443, 47
        %s446 = smul.addr %s445, 4
        %s447 = scalar_lea.vmem %s4, %s446
        %p448 = pneg %p131
        %p449 = pneg %p128
        %p450 = pneg %p152
        %p451 = pneg %p149
        %s452 = smul.u32 16, %s16
        %p453 = scmp.lt.s32.totalorder %s452, 47
        %s454 = scalar_select %p453, %s452, 47
        %s455 = smul.addr %s454, 4
        %s456 = scalar_lea.vmem %s4, %s455
        %s457 = smul.u32 16, %s16
        %p459 = scmp.eq.s32.totalorder %s16, 0
        // Predicated region
        $region123: #{fwd.12} parent=113 // pred_check
          %p460 = pneg %p459
        $region124: #{fwd.12} parent=113 // pred_check_branch
          %462 = sbr.rel (%p460) target = $region126
        $region125: #{fwd.12} parent=113 // pred_region
          %v463 = vld [vmem:[%s0] sm:$0x3]
          %v464 = vmul.f32 %v463, %v463
          %vm465 = vcmask 1041408
          %v466 = vsel %vm465, %v464, 0.0
          %467 = vadd.xlane.f32.xlu0 %v466
          %v468 = vpop.xlane.xlu0 %467
          %v469 = vrcp.pop 128.0
          %v470 = vmul.f32 %v468, %v469
          %v471 = vadd.f32 %v470, 1e-05
          %v472 = vrsqrt.pop %v471
          %v473 = vmul.f32 %v463, %v472
          %v474 = vld [vmem:[%s1] sm:$0x1]
          %v476 = vlaneseq
          %v477 = vshrl.u32 %v476, 7
          %v478 = vsub.s32 0, %v477
          %v479 = vrot.slane %v474, %v478
          %v481 = vmul.f32 %v473, %v479
          %v482 = vpack.c.bf16 %v481, %v481
          %483 = vst [vmem:[#allocation2] sm:$0x1] %v482
          %484 = vst [vmem:[%s5] sm:$0x3] 0.0
        $region126: #{fwd.12} parent=113 // pred_fallthru
          _
        %v485 = vld [vmem:[#allocation2] sm:$0x1]
        %v486 = vld [vmem:[%s416] sm:$0xf]
        %v487 = vld [vmem:[%s416 + $0x4] sm:$0xf]
        %v488 = vld [vmem:[%s416 + $0x8] sm:$0xf]
        %v489 = vld [vmem:[%s416 + $0xc] sm:$0xf]
        %v490 = vld [vmem:[%s416 + $0x10] sm:$0xf]
        %v491 = vld [vmem:[%s416 + $0x14] sm:$0xf]
        %v492 = vld [vmem:[%s416 + $0x18] sm:$0xf]
        %v493 = vld [vmem:[%s416 + $0x1c] sm:$0xf]
        %v494 = vld [vmem:[%s416 + $0x20] sm:$0xf]
        %v495 = vld [vmem:[%s416 + $0x24] sm:$0xf]
        %v496 = vld [vmem:[%s416 + $0x28] sm:$0xf]
        %v497 = vld [vmem:[%s416 + $0x2c] sm:$0xf]
        %v498 = vld [vmem:[%s416 + $0x30] sm:$0xf]
        %v499 = vld [vmem:[%s416 + $0x34] sm:$0xf]
        %v500 = vld [vmem:[%s416 + $0x38] sm:$0xf]
        %v501 = vld [vmem:[%s416 + $0x3c] sm:$0xf]
        %v518 = vunpack.c.l.b16 %v486
        %v519 = vunpack.c.l.b16 %v487
        %v520 = vunpack.c.l.b16 %v488
        %v521 = vunpack.c.l.b16 %v489
        %v522 = vunpack.c.l.b16 %v490
        %v523 = vunpack.c.l.b16 %v491
        %v524 = vunpack.c.l.b16 %v492
        %v525 = vunpack.c.l.b16 %v493
        %v526 = vunpack.c.l.b16 %v494
        %v527 = vunpack.c.l.b16 %v495
        %v528 = vunpack.c.l.b16 %v496
        %v529 = vunpack.c.l.b16 %v497
        %v530 = vunpack.c.l.b16 %v498
        %v531 = vunpack.c.l.b16 %v499
        %v532 = vunpack.c.l.b16 %v500
        %v533 = vunpack.c.l.b16 %v501
        %v534 = vpack.c.b16 %v519, %v518
        %v535 = vpack.c.b16 %v521, %v520
        %v536 = vpack.c.b16 %v523, %v522
        %v537 = vpack.c.b16 %v525, %v524
        %v538 = vpack.c.b16 %v527, %v526
        %v539 = vpack.c.b16 %v529, %v528
        %v540 = vpack.c.b16 %v531, %v530
        %v541 = vpack.c.b16 %v533, %v532
        %550 = vmatprep.subr.bf16.mxu0 0
        %551 = vmatpush1.bf16.msra.mxu0 %v541
        %552 = vmatprep.subr.bf16.mxu0 0
        %553 = vmatpush1.bf16.msra.mxu0 %v540
        %554 = vmatprep.subr.bf16.mxu0 0
        %555 = vmatpush1.bf16.msra.mxu0 %v539
        %556 = vmatprep.subr.bf16.mxu0 0
        %557 = vmatpush1.bf16.msra.mxu0 %v538
        %558 = vmatprep.subr.bf16.mxu0 0
        %559 = vmatpush1.bf16.msra.mxu0 %v537
        %560 = vmatprep.subr.bf16.mxu0 0
        %561 = vmatpush1.bf16.msra.mxu0 %v536
        %562 = vmatprep.subr.bf16.mxu0 0
        %563 = vmatpush1.bf16.msra.mxu0 %v535
        %564 = vmatprep.subr.bf16.mxu0 0
        %565 = vmatpush1.bf16.msra.mxu0 %v534
        %566 = vmatprep.subr.bf16.mxu0 0
        %567 = vmatpush2.bf16.msra.mxu0 0
        %568 = vmatprep.subr.bf16.mxu0 0
        %569 = vmatpush2.bf16.msra.mxu0 0
        %570 = vmatprep.subr.bf16.mxu0 0
        %571 = vmatpush2.bf16.msra.mxu0 0
        %572 = vmatprep.subr.bf16.mxu0 0
        %573 = vmatpush2.bf16.msra.mxu0 0
        %574 = vmatprep.subr.bf16.mxu0 0
        %575 = vmatpush2.bf16.msra.mxu0 0
        %576 = vmatprep.subr.bf16.mxu0 0
        %577 = vmatpush2.bf16.msra.mxu0 0
        %578 = vmatprep.subr.bf16.mxu0 0
        %579 = vmatpush2.bf16.msra.mxu0 0
        %580 = vmatprep.subr.bf16.mxu0 0
        %581 = vmatpush2.bf16.msra.mxu0 0
        %582 = vmatprep.mubr.bf16.mxu0 0
        %583 = vmatmul.mubr.bf16.gmra.mxu0 %v485
        %v584 = vpop.f32.mrf.mxu0
        %v585 = vadd.f32 0.0, %v584
        %v586 = vpop.f32.mrf.mxu0
        %v587 = vpop.f32.mrf.mxu0
        %v588 = vpop.f32.mrf.mxu0
        %589 = vdwg.mxu0
        %v590 = vld [vmem:[%s423] sm:$0xf]
        %v591 = vld [vmem:[%s423 + $0x4] sm:$0xf]
        %v592 = vld [vmem:[%s423 + $0x8] sm:$0xf]
        %v593 = vld [vmem:[%s423 + $0xc] sm:$0xf]
        %v594 = vld [vmem:[%s423 + $0x10] sm:$0xf]
        %v595 = vld [vmem:[%s423 + $0x14] sm:$0xf]
        %v596 = vld [vmem:[%s423 + $0x18] sm:$0xf]
        %v597 = vld [vmem:[%s423 + $0x1c] sm:$0xf]
        %v598 = vld [vmem:[%s423 + $0x20] sm:$0xf]
        %v599 = vld [vmem:[%s423 + $0x24] sm:$0xf]
        %v600 = vld [vmem:[%s423 + $0x28] sm:$0xf]
        %v601 = vld [vmem:[%s423 + $0x2c] sm:$0xf]
        %v602 = vld [vmem:[%s423 + $0x30] sm:$0xf]
        %v603 = vld [vmem:[%s423 + $0x34] sm:$0xf]
        %v604 = vld [vmem:[%s423 + $0x38] sm:$0xf]
        %v605 = vld [vmem:[%s423 + $0x3c] sm:$0xf]
        %v622 = vunpack.c.l.b16 %v590
        %v623 = vunpack.c.l.b16 %v591
        %v624 = vunpack.c.l.b16 %v592
        %v625 = vunpack.c.l.b16 %v593
        %v626 = vunpack.c.l.b16 %v594
        %v627 = vunpack.c.l.b16 %v595
        %v628 = vunpack.c.l.b16 %v596
        %v629 = vunpack.c.l.b16 %v597
        %v630 = vunpack.c.l.b16 %v598
        %v631 = vunpack.c.l.b16 %v599
        %v632 = vunpack.c.l.b16 %v600
        %v633 = vunpack.c.l.b16 %v601
        %v634 = vunpack.c.l.b16 %v602
        %v635 = vunpack.c.l.b16 %v603
        %v636 = vunpack.c.l.b16 %v604
        %v637 = vunpack.c.l.b16 %v605
        %v638 = vpack.c.b16 %v623, %v622
        %v639 = vpack.c.b16 %v625, %v624
        %v640 = vpack.c.b16 %v627, %v626
        %v641 = vpack.c.b16 %v629, %v628
        %v642 = vpack.c.b16 %v631, %v630
        %v643 = vpack.c.b16 %v633, %v632
        %v644 = vpack.c.b16 %v635, %v634
        %v645 = vpack.c.b16 %v637, %v636
        %654 = vmatprep.subr.bf16.mxu0 0
        %655 = vmatpush1.bf16.msra.mxu0 %v645
        %656 = vmatprep.subr.bf16.mxu0 0
        %657 = vmatpush1.bf16.msra.mxu0 %v644
        %658 = vmatprep.subr.bf16.mxu0 0
        %659 = vmatpush1.bf16.msra.mxu0 %v643
        %660 = vmatprep.subr.bf16.mxu0 0
        %661 = vmatpush1.bf16.msra.mxu0 %v642
        %662 = vmatprep.subr.bf16.mxu0 0
        %663 = vmatpush1.bf16.msra.mxu0 %v641
        %664 = vmatprep.subr.bf16.mxu0 0
        %665 = vmatpush1.bf16.msra.mxu0 %v640
        %666 = vmatprep.subr.bf16.mxu0 0
        %667 = vmatpush1.bf16.msra.mxu0 %v639
        %668 = vmatprep.subr.bf16.mxu0 0
        %669 = vmatpush1.bf16.msra.mxu0 %v638
        %670 = vmatprep.subr.bf16.mxu0 0
        %671 = vmatpush2.bf16.msra.mxu0 0
        %672 = vmatprep.subr.bf16.mxu0 0
        %673 = vmatpush2.bf16.msra.mxu0 0
        %674 = vmatprep.subr.bf16.mxu0 0
        %675 = vmatpush2.bf16.msra.mxu0 0
        %676 = vmatprep.subr.bf16.mxu0 0
        %677 = vmatpush2.bf16.msra.mxu0 0
        %678 = vmatprep.subr.bf16.mxu0 0
        %679 = vmatpush2.bf16.msra.mxu0 0
        %680 = vmatprep.subr.bf16.mxu0 0
        %681 = vmatpush2.bf16.msra.mxu0 0
        %682 = vmatprep.subr.bf16.mxu0 0
        %683 = vmatpush2.bf16.msra.mxu0 0
        %684 = vmatprep.subr.bf16.mxu0 0
        %685 = vmatpush2.bf16.msra.mxu0 0
        %686 = vmatprep.mubr.bf16.mxu0 0
        %687 = vmatmul.mubr.bf16.gmra.mxu0 %v485
        %v688 = vpop.f32.mrf.mxu0
        %v689 = vadd.f32 0.0, %v688
        %v690 = vpop.f32.mrf.mxu0
        %v691 = vpop.f32.mrf.mxu0
        %v692 = vpop.f32.mrf.mxu0
        %693 = vdwg.mxu0
        %v694 = vxor.u32 %v585, 2147483648
        %v695 = vmul.f32 %v694, 1.442695
        %v696 = vpow.pop %v695
        %v697 = vadd.f32 %v696, 1.0
        %v698 = vrcp.pop %v697
        %v699 = vmul.f32 1.0, %v698
        %v700 = vmul.f32 %v585, %v699
        %v701 = vmul.f32 %v700, %v689
        %v702 = vld [vmem:[%s5] sm:$0x3]
        %v703 = vpack.c.bf16 %v701, %v701
        %v704 = vld [vmem:[%s456] sm:$0xf]
        %v705 = vld [vmem:[%s456 + $0x4] sm:$0xf]
        %v706 = vld [vmem:[%s456 + $0x8] sm:$0xf]
        %v707 = vld [vmem:[%s456 + $0xc] sm:$0xf]
        %v708 = vld [vmem:[%s456 + $0x10] sm:$0xf]
        %v709 = vld [vmem:[%s456 + $0x14] sm:$0xf]
        %v710 = vld [vmem:[%s456 + $0x18] sm:$0xf]
        %v711 = vld [vmem:[%s456 + $0x1c] sm:$0xf]
        %v712 = vld [vmem:[%s456 + $0x20] sm:$0xf]
        %v713 = vld [vmem:[%s456 + $0x24] sm:$0xf]
        %v714 = vld [vmem:[%s456 + $0x28] sm:$0xf]
        %v715 = vld [vmem:[%s456 + $0x2c] sm:$0xf]
        %v716 = vld [vmem:[%s456 + $0x30] sm:$0xf]
        %v717 = vld [vmem:[%s456 + $0x34] sm:$0xf]
        %v718 = vld [vmem:[%s456 + $0x38] sm:$0xf]
        %v719 = vld [vmem:[%s456 + $0x3c] sm:$0xf]
        %v736 = vunpack.c.l.b16 %v704
        %v737 = vunpack.c.l.b16 %v705
        %v738 = vunpack.c.l.b16 %v706
        %v739 = vunpack.c.l.b16 %v707
        %v740 = vunpack.c.l.b16 %v708
        %v741 = vunpack.c.l.b16 %v709
        %v742 = vunpack.c.l.b16 %v710
        %v743 = vunpack.c.l.b16 %v711
        %v744 = vunpack.c.l.b16 %v712
        %v745 = vunpack.c.l.b16 %v713
        %v746 = vunpack.c.l.b16 %v714
        %v747 = vunpack.c.l.b16 %v715
        %v748 = vunpack.c.l.b16 %v716
        %v749 = vunpack.c.l.b16 %v717
        %v750 = vunpack.c.l.b16 %v718
        %v751 = vunpack.c.l.b16 %v719
        %v752 = vpack.c.b16 %v737, %v736
        %v753 = vpack.c.b16 %v739, %v738
        %v754 = vpack.c.b16 %v741, %v740
        %v755 = vpack.c.b16 %v743, %v742
        %v756 = vpack.c.b16 %v745, %v744
        %v757 = vpack.c.b16 %v747, %v746
        %v758 = vpack.c.b16 %v749, %v748
        %v759 = vpack.c.b16 %v751, %v750
        %768 = vmatprep.subr.bf16.mxu0 0
        %769 = vmatpush1.bf16.msra.mxu0 %v759
        %770 = vmatprep.subr.bf16.mxu0 0
        %771 = vmatpush1.bf16.msra.mxu0 %v758
        %772 = vmatprep.subr.bf16.mxu0 0
        %773 = vmatpush1.bf16.msra.mxu0 %v757
        %774 = vmatprep.subr.bf16.mxu0 0
        %775 = vmatpush1.bf16.msra.mxu0 %v756
        %776 = vmatprep.subr.bf16.mxu0 0
        %777 = vmatpush1.bf16.msra.mxu0 %v755
        %778 = vmatprep.subr.bf16.mxu0 0
        %779 = vmatpush1.bf16.msra.mxu0 %v754
        %780 = vmatprep.subr.bf16.mxu0 0
        %781 = vmatpush1.bf16.msra.mxu0 %v753
        %782 = vmatprep.subr.bf16.mxu0 0
        %783 = vmatpush1.bf16.msra.mxu0 %v752
        %784 = vmatprep.subr.bf16.mxu0 0
        %785 = vmatpush2.bf16.msra.mxu0 0
        %786 = vmatprep.subr.bf16.mxu0 0
        %787 = vmatpush2.bf16.msra.mxu0 0
        %788 = vmatprep.subr.bf16.mxu0 0
        %789 = vmatpush2.bf16.msra.mxu0 0
        %790 = vmatprep.subr.bf16.mxu0 0
        %791 = vmatpush2.bf16.msra.mxu0 0
        %792 = vmatprep.subr.bf16.mxu0 0
        %793 = vmatpush2.bf16.msra.mxu0 0
        %794 = vmatprep.subr.bf16.mxu0 0
        %795 = vmatpush2.bf16.msra.mxu0 0
        %796 = vmatprep.subr.bf16.mxu0 0
        %797 = vmatpush2.bf16.msra.mxu0 0
        %798 = vmatprep.subr.bf16.mxu0 0
        %799 = vmatpush2.bf16.msra.mxu0 0
        %800 = vmatprep.mubr.bf16.mxu0 0
        %801 = vmatmul.mubr.bf16.gmra.mxu0 %v703
        %v802 = vpop.f32.mrf.mxu0
        %v803 = vadd.f32 0.0, %v802
        %v804 = vpop.f32.mrf.mxu0
        %v805 = vpop.f32.mrf.mxu0
        %v806 = vpop.f32.mrf.mxu0
        %807 = vdwg.mxu0
        %v808 = vadd.f32 %v702, %v803
        %809 = vst [vmem:[%s5] sm:$0x3] %v808
        // Predicated region
        $region127: #{fwd.12} parent=113 // pred_check
          %p810 = pneg %p149
        $region128: #{fwd.12} parent=113 // pred_check_branch
          %812 = sbr.rel (%p810) target = $region130
        $region129: #{fwd.12} parent=113 // pred_region
          _
        $region130: #{fwd.12} parent=113 // pred_fallthru
          _
        // Predicated region
        $region131: #{fwd.12} parent=113 // pred_check
          %p813 = pneg %p149
        $region132: #{fwd.12} parent=113 // pred_check_branch
          %815 = sbr.rel (%p813) target = $region134
        $region133: #{fwd.12} parent=113 // pred_region
          _
        $region134: #{fwd.12} parent=113 // pred_fallthru
          _
      $region114: #{fwd.12} parent=5 // pred_fallthru
        _
      %p816 = scmp.le.s32.totalorder 2, %s11
      // Predicated region
      $region135: #{fwd.12} parent=5 // pred_check
        %p817 = pneg %p816
      $region136: #{fwd.12} parent=5 // pred_check_branch
        %819 = sbr.rel (%p817) target = $region138
      $region137: #{fwd.12} parent=5 // pred_region
        %s820 = ssub.s32 %s11, 2
      $region138: #{fwd.12} parent=5 // pred_fallthru
        _
    $region6: #{fwd.12} parent=1 // loop_footer
      %s15 = sadd.s32 1, %s11
    $region7: #{fwd.12} parent=1 // loop_footer_branch
      %10 = sbr.rel target = $region3
    $region8: #{fwd.12} parent=1 // loop_exit
      _

</llo_original>
